<compile_context>
chip_gen: v5e
topology: v5e:2x2
jax: 0.10.0
libtpu: 0.0.40
codegen_flags: <defaults>
</compile_context>

<pallas_src>
import functools

import jax
import jax.numpy as jnp
from jax.experimental import pallas as pl
from jax.experimental.pallas import tpu as pltpu


def _signature_loss_kernel(dx_ref, dy_ref, idx_ref, out_ref, *, p, normalise):
    dx = dx_ref[0].astype(jnp.float32)          # (N, N)
    dy = dy_ref[0].astype(jnp.float32)          # (N, N)

    if normalise:
        # Two scalar reciprocals instead of ~2*N*N full-matrix divides.
        # (Degenerate all-zero distance matrix yields NaN, matching reference.)
        inv_mx = 1.0 / jnp.max(dx)
        inv_my = 1.0 / jnp.max(dy)
        dd = dx * inv_mx - dy * inv_my          # fused normalise + difference
    else:
        dd = dx - dy

    n = dd.shape[-1]
    two_m = idx_ref.shape[-1]                   # 2 * M_pad (multiple of 128)
    m_pad = two_m // 2

    idx = idx_ref[0]                            # (2, 2*M_pad) int32
    col_idx = idx[0:1, :]                       # [xc | yc]  (1, 2*M_pad)
    row_idx = idx[1:2, :]                       # [xr | yr]  (1, 2*M_pad)

    # Sublane iota, reused for both the column selector and the row mask.
    sub_iota = jax.lax.broadcasted_iota(jnp.int32, (n, two_m), 0)

    # Transposed one-hot column selector; padding index -1 never matches, so
    # padded lanes are all-zero columns and contribute exactly 0.
    sel_c = (sub_iota == col_idx).astype(jnp.float32)        # (N, 2*M_pad)

    # Single fused MXU gather of both signature differences:
    #   g[i, m] = dd[i, col_idx[m]]
    g = jnp.dot(dd, sel_c,
                preferred_element_type=jnp.float32,
                precision=jax.lax.Precision.HIGHEST)          # (N, 2*M_pad)

    # Fold the row selection straight into the |.|^p contribution — no f32
    # one-hot row mask and no masked intermediate are materialised.
    row_match = sub_iota == row_idx
    if p == 2:
        contrib = jnp.where(row_match, g * g, 0.0)
        n_xy = jnp.sqrt(jnp.sum(contrib[:, :m_pad]))
        n_yx = jnp.sqrt(jnp.sum(contrib[:, m_pad:]))
    else:
        contrib = jnp.where(row_match, jnp.abs(g) ** p, 0.0)
        inv_p = 1.0 / p
        n_xy = jnp.sum(contrib[:, :m_pad]) ** inv_p
        n_yx = jnp.sum(contrib[:, m_pad:]) ** inv_p

    loss = 0.5 * (n_xy + n_yx)
    # Lane-dense (1, 1, 128) output tile (single unmasked vreg store).
    out_ref[...] = jnp.full(out_ref.shape, loss, dtype=out_ref.dtype)


def _pad_index_column(pairing, col, m_pad):
    """Extract pairing column `col` (B, M) and pad to m_pad lanes with -1."""
    b, m, _ = pairing.shape
    idx = pairing[:, :, col].astype(jnp.int32)
    if m_pad > m:
        idx = jnp.concatenate(
            [idx, jnp.full((b, m_pad - m), -1, dtype=jnp.int32)], axis=1)
    return idx                                   # (B, m_pad)


def distances_signature_loss(x_dist, y_dist, x_pairing, y_pairing,
                             *, p=2, normalise=True):
    """Forward pass of DistancesSignatureLoss for dimensions=[0].

    Accepts a single problem (x_dist: (N,N), x_pairing: (M,3)) or a batch
    (x_dist: (B,N,N), x_pairing: (B,M,3)); returns a scalar / (B,) losses.
    """
    # TODO(synk): 4-column (>0-dimensional) generators
    # (abs(destroyer - creator)) are not implemented; the default
    # dimensions=0 path uses 3-column pairings only.
    single = x_dist.ndim == 2
    if single:
        x_dist, y_dist = x_dist[None], y_dist[None]
        x_pairing, y_pairing = x_pairing[None], y_pairing[None]

    b, n, _ = x_dist.shape
    m = x_pairing.shape[1]
    m_pad = max(128, ((m + 127) // 128) * 128)   # lane-aligned pair count

    # NOTE: pairing indices outside [0, N) silently select 0.0 here (PyTorch
    # advanced indexing would raise); validate upstream if needed.
    xr = _pad_index_column(x_pairing, 1, m_pad)
    xc = _pad_index_column(x_pairing, 2, m_pad)
    yr = _pad_index_column(y_pairing, 1, m_pad)
    yc = _pad_index_column(y_pairing, 2, m_pad)

    # Lane-major packed index tile per batch element:
    #   row 0 = column indices [xc | yc], row 1 = row indices [xr | yr].
    col_row = jnp.concatenate([xc, yc], axis=1)              # (B, 2*m_pad)
    row_row = jnp.concatenate([xr, yr], axis=1)              # (B, 2*m_pad)
    idx = jnp.stack([col_row, row_row], axis=1)              # (B, 2, 2*m_pad)

    kernel = functools.partial(_signature_loss_kernel,
                               p=float(p), normalise=bool(normalise))

    # Distance matrices are passed through in their native dtype and upcast
    # in-kernel after the load.
    dist_spec = pl.BlockSpec((1, n, n), lambda i: (i, 0, 0))
    idx_spec = pl.BlockSpec((1, 2, 2 * m_pad), lambda i: (i, 0, 0))

    # TODO(synk): for large N, add a second "arbitrary" grid axis tiling dd's
    # lane dimension (plus vmem_limit_bytes) so v7x's 64 MiB VMEM keeps
    # double-buffering; not needed at these sizes.
    out = pl.pallas_call(
        kernel,
        grid=(b,),
        in_specs=[dist_spec, dist_spec, idx_spec],
        out_specs=pl.BlockSpec((1, 1, 128), lambda i: (i, 0, 0)),
        out_shape=jax.ShapeDtypeStruct((b, 1, 128), jnp.float32),
        compiler_params=pltpu.CompilerParams(
            dimension_semantics=("parallel",)),
    )(x_dist, y_dist, idx)

    losses = out[:, 0, 0]
    return losses[0] if single else losses


def _reference_loss(x_dist, y_dist, x_pairing, y_pairing, *, p=2, normalise=True):
    """Pure-JAX replica of the PyTorch forward (dimensions=[0])."""
    if normalise:
        x_dist = x_dist / x_dist.max()
        y_dist = y_dist / y_dist.max()
    x_sig_x = x_dist[x_pairing[:, 1], x_pairing[:, 2]]
    y_sig_x = y_dist[x_pairing[:, 1], x_pairing[:, 2]]
    y_sig_y = y_dist[y_pairing[:, 1], y_pairing[:, 2]]
    x_sig_y = x_dist[y_pairing[:, 1], y_pairing[:, 2]]
    xy = 0.5 * jnp.linalg.norm(x_sig_x - y_sig_x, ord=p)
    yx = 0.5 * jnp.linalg.norm(y_sig_y - x_sig_y, ord=p)
    return xy + yx


def _pairwise_distances(points):
    d2 = jnp.sum((points[:, None, :] - points[None, :, :]) ** 2, axis=-1)
    return jnp.sqrt(jnp.maximum(d2, 0.0))


if __name__ == "__main__":
    key = jax.random.PRNGKey(0)
    k_x, k_y, k_px, k_py = jax.random.split(key, 4)

    B = 2        # batch of independent loss evaluations (grid axis, "parallel")
    N = 128      # points per point cloud
    D_FEAT = 8   # latent feature dim (only used to build distance matrices)
    M = 127      # 0-dim persistence pairs (N - 1 MST edges)

    # Deterministic synthetic point clouds -> pairwise distance matrices.
    x_points = jax.random.normal(k_x, (B, N, D_FEAT), dtype=jnp.float32)
    y_points = jax.random.normal(k_y, (B, N, D_FEAT), dtype=jnp.float32)
    x_dist = jax.vmap(_pairwise_distances)(x_points)
    y_dist = jax.vmap(_pairwise_distances)(y_points)

    # Deterministic synthetic 0-dim persistence pairings: (B, M, 3) int32.
    x_pairing = jax.random.randint(k_px, (B, M, 3), 0, N, dtype=jnp.int32)
    y_pairing = jax.random.randint(k_py, (B, M, 3), 0, N, dtype=jnp.int32)

    losses = distances_signature_loss(x_dist, y_dist, x_pairing, y_pairing,
                                      p=2, normalise=True)
    losses = jax.block_until_ready(losses)

    refs = jnp.stack([
        _reference_loss(x_dist[i], y_dist[i], x_pairing[i], y_pairing[i],
                        p=2, normalise=True)
        for i in range(B)])
    refs = jax.block_until_ready(refs)

    assert losses.shape == (B,), f"unexpected output shape {losses.shape}"
    assert bool(jnp.all(jnp.isfinite(losses))), "kernel produced non-finite loss"
    assert jnp.allclose(losses, refs, rtol=1e-4, atol=1e-5), (
        f"mismatch: pallas={losses} ref={refs}")

    print("KERNEL_OK")
</pallas_src>

<mosaic_0001>
module attributes {stable_mosaic.version = 11 : i64} {
  func.func @_signature_loss_kernel(%arg0: i32, %arg1: memref<1x128x128xf32, #tpu.memory_space<vmem>>, %arg2: memref<1x128x128xf32, #tpu.memory_space<vmem>>, %arg3: memref<1x2x256xi32, #tpu.memory_space<vmem>>, %arg4: memref<1x1x128xf32, #tpu.memory_space<vmem>>) attributes {dimension_semantics = [#tpu.dimension_semantics<parallel>], iteration_bounds = array<i64: 2>, scalar_prefetch = 0 : i64, scratch_operands = 0 : i64, tpu.core_type = #tpu.core_type<tc>, window_params = [{transform_indices = @transform_0, window_bounds = array<i64: 1, 128, 128>}, {transform_indices = @transform_1, window_bounds = array<i64: 1, 128, 128>}, {transform_indices = @transform_2, window_bounds = array<i64: 1, 2, 256>}, {transform_indices = @transform_3, window_bounds = array<i64: 1, 1, 128>}]} {
    %c0 = arith.constant 0 : index
    %c0_0 = arith.constant 0 : index
    %c0_1 = arith.constant 0 : index
    %0 = vector.load %arg1[%c0, %c0_0, %c0_1] : memref<1x128x128xf32, #tpu.memory_space<vmem>>, vector<1x128x128xf32>
    %1 = vector.shape_cast %0 : vector<1x128x128xf32> to vector<128x128xf32>
    %c0_2 = arith.constant 0 : index
    %c0_3 = arith.constant 0 : index
    %c0_4 = arith.constant 0 : index
    %2 = vector.load %arg2[%c0_2, %c0_3, %c0_4] : memref<1x128x128xf32, #tpu.memory_space<vmem>>, vector<1x128x128xf32>
    %3 = vector.shape_cast %2 : vector<1x128x128xf32> to vector<128x128xf32>
    %4 = vector.shape_cast %1 : vector<128x128xf32> to vector<1x128x128xf32>
    %cst = arith.constant dense<0xFF800000> : vector<1xf32>
    %5 = vector.multi_reduction <maximumf>, %4, %cst [1, 2] : vector<1x128x128xf32> to vector<1xf32>
    %6 = vector.shape_cast %5 : vector<1xf32> to vector<1x1x1xf32>
    %7 = vector.extract %6[0, 0, 0] : f32 from vector<1x1x1xf32>
    %cst_5 = arith.constant 1.000000e+00 : f32
    %8 = arith.divf %cst_5, %7 : f32
    %9 = vector.shape_cast %3 : vector<128x128xf32> to vector<1x128x128xf32>
    %cst_6 = arith.constant dense<0xFF800000> : vector<1xf32>
    %10 = vector.multi_reduction <maximumf>, %9, %cst_6 [1, 2] : vector<1x128x128xf32> to vector<1xf32>
    %11 = vector.shape_cast %10 : vector<1xf32> to vector<1x1x1xf32>
    %12 = vector.extract %11[0, 0, 0] : f32 from vector<1x1x1xf32>
    %cst_7 = arith.constant 1.000000e+00 : f32
    %13 = arith.divf %cst_7, %12 : f32
    %14 = vector.broadcast %8 : f32 to vector<128x128xf32>
    %15 = arith.mulf %1, %14 : vector<128x128xf32>
    %16 = vector.broadcast %13 : f32 to vector<128x128xf32>
    %17 = arith.mulf %3, %16 : vector<128x128xf32>
    %18 = arith.subf %15, %17 : vector<128x128xf32>
    %c0_8 = arith.constant 0 : index
    %c0_9 = arith.constant 0 : index
    %c0_10 = arith.constant 0 : index
    %19 = vector.load %arg3[%c0_8, %c0_9, %c0_10] : memref<1x2x256xi32, #tpu.memory_space<vmem>>, vector<1x2x256xi32>
    %20 = vector.shape_cast %19 : vector<1x2x256xi32> to vector<2x256xi32>
    %21 = vector.extract_strided_slice %20 {offsets = [0, 0], sizes = [1, 256], strides = [1, 1]} : vector<2x256xi32> to vector<1x256xi32>
    %22 = vector.extract_strided_slice %20 {offsets = [1, 0], sizes = [1, 256], strides = [1, 1]} : vector<2x256xi32> to vector<1x256xi32>
    %23 = tpu.iota {dimensions = array<i32: 0>} : vector<128x256xi32>
    %24 = vector.broadcast %21 : vector<1x256xi32> to vector<128x256xi32>
    %25 = arith.cmpi eq, %23, %24 : vector<128x256xi32>
    %26 = arith.extui %25 : vector<128x256xi1> to vector<128x256xi32>
    %27 = arith.sitofp %26 : vector<128x256xi32> to vector<128x256xf32>
    %cst_11 = arith.constant dense<0.000000e+00> : vector<128x256xf32>
    %28 = tpu.matmul %18, %27, %cst_11 {dimension_numbers = #tpu.dot_dimension_numbers<[1], [0], [0], [1], [0, 0, 1, 1], [], []>, precision = #tpu.contract_precision<fp32>} : vector<128x128xf32>, vector<128x256xf32>, vector<128x256xf32> -> vector<128x256xf32>
    %29 = vector.broadcast %22 : vector<1x256xi32> to vector<128x256xi32>
    %30 = arith.cmpi eq, %23, %29 : vector<128x256xi32>
    %31 = arith.mulf %28, %28 : vector<128x256xf32>
    %cst_12 = arith.constant 0.000000e+00 : f32
    %32 = vector.broadcast %cst_12 : f32 to vector<128x256xf32>
    %33 = arith.select %30, %31, %32 : vector<128x256xi1>, vector<128x256xf32>
    %34 = vector.extract_strided_slice %33 {offsets = [0, 0], sizes = [128, 128], strides = [1, 1]} : vector<128x256xf32> to vector<128x128xf32>
    %35 = vector.shape_cast %34 : vector<128x128xf32> to vector<1x128x128xf32>
    %cst_13 = arith.constant dense<0.000000e+00> : vector<1xf32>
    %36 = vector.multi_reduction <add>, %35, %cst_13 [1, 2] : vector<1x128x128xf32> to vector<1xf32>
    %37 = vector.shape_cast %36 : vector<1xf32> to vector<1x1x1xf32>
    %38 = vector.extract %37[0, 0, 0] : f32 from vector<1x1x1xf32>
    %39 = math.sqrt %38 : f32
    %40 = vector.extract_strided_slice %33 {offsets = [0, 128], sizes = [128, 128], strides = [1, 1]} : vector<128x256xf32> to vector<128x128xf32>
    %41 = vector.shape_cast %40 : vector<128x128xf32> to vector<1x128x128xf32>
    %cst_14 = arith.constant dense<0.000000e+00> : vector<1xf32>
    %42 = vector.multi_reduction <add>, %41, %cst_14 [1, 2] : vector<1x128x128xf32> to vector<1xf32>
    %43 = vector.shape_cast %42 : vector<1xf32> to vector<1x1x1xf32>
    %44 = vector.extract %43[0, 0, 0] : f32 from vector<1x1x1xf32>
    %45 = math.sqrt %44 : f32
    %46 = arith.addf %39, %45 : f32
    %cst_15 = arith.constant 5.000000e-01 : f32
    %47 = arith.mulf %cst_15, %46 : f32
    %48 = vector.broadcast %47 : f32 to vector<1x1x128xf32>
    %c0_16 = arith.constant 0 : index
    %c0_17 = arith.constant 0 : index
    %c0_18 = arith.constant 0 : index
    %49 = vector.load %arg4[%c0_16, %c0_17, %c0_18] : memref<1x1x128xf32, #tpu.memory_space<vmem>>, vector<1x1x128xf32>
    tpu.vector_store %arg4[%c0_16, %c0_17, %c0_18], %48 {strides = array<i32>} : memref<1x1x128xf32, #tpu.memory_space<vmem>>, vector<1x1x128xf32>,
    return
  }
  func.func @transform_0(%arg0: i32) -> (i32, i32, i32) {
    %c0_i32 = arith.constant 0 : i32
    %c0_i32_0 = arith.constant 0 : i32
    %c0_i32_1 = arith.constant 0 : i32
    return %arg0, %c0_i32, %c0_i32_0 : i32, i32, i32
  }
  func.func @transform_1(%arg0: i32) -> (i32, i32, i32) {
    %c0_i32 = arith.constant 0 : i32
    %c0_i32_0 = arith.constant 0 : i32
    %c0_i32_1 = arith.constant 0 : i32
    return %arg0, %c0_i32, %c0_i32_0 : i32, i32, i32
  }
  func.func @transform_2(%arg0: i32) -> (i32, i32, i32) {
    %c0_i32 = arith.constant 0 : i32
    %c0_i32_0 = arith.constant 0 : i32
    %c0_i32_1 = arith.constant 0 : i32
    return %arg0, %c0_i32, %c0_i32_0 : i32, i32, i32
  }
  func.func @transform_3(%arg0: i32) -> (i32, i32, i32) {
    %c0_i32 = arith.constant 0 : i32
    %c0_i32_0 = arith.constant 0 : i32
    %c0_i32_1 = arith.constant 0 : i32
    return %arg0, %c0_i32, %c0_i32_0 : i32, i32, i32
  }
}

</mosaic_0001>

<llo_original>
// kernel: tpu_custom_call.1
$region0: #{tpu_custom_call.1}
  #allocation0 [shape = 'u32[]', space=smem, size = 0x4, offset = 0x4, fixed_abs, tag = 'smem constant byte address 0x4 - core index']
  #allocation1 [shape = 'u32[72,128]{1,0:T(1,128)}', space=vmem, size = 0x9000, scoped, tag = 'internal scratch']
  %s0 = inlined_call_operand.hbm [shape: f32[2,128,128], index: 0, kind: input, shape index: {}]
  %s1 = inlined_call_operand.hbm [shape: f32[2,128,128], index: 1, kind: input, shape index: {}]
  %s2 = inlined_call_operand.hbm [shape: s32[2,2,256], index: 2, kind: input, shape index: {}]
  %s3 = inlined_call_operand.hbm [shape: f32[2,1,128], index: 3, kind: output, shape index: {}]
  %s4 = sld [smem:[#allocation0]]
  $region57: #{tpu_custom_call.1} parent=0
    _
  %s6 = ssub.s32 1, %s4
  %s7 = scalar_select 0, %s6, %s4
  $region1: #{tpu_custom_call.1} parent=0
    #allocation2 [shape = 'u8[131072]{0}', space=vmem, size = 0x20000, scoped, tag = 'input window, operand 0']
    #allocation3 [shape = 's32[2]{0}', space=sflag, size = 0x8, scoped, tag = 'scoped memory for tpu_custom_call.1']
    #allocation4 [shape = 's32[2]{0}', space=sflag, size = 0x8, scoped, tag = 'scoped memory for tpu_custom_call.1']
    #allocation5 [shape = 'u8[131072]{0}', space=vmem, size = 0x20000, scoped, tag = 'input window, operand 1']
    #allocation6 [shape = 's32[2]{0}', space=sflag, size = 0x8, scoped, tag = 'scoped memory for tpu_custom_call.1']
    #allocation7 [shape = 'u8[4096]{0}', space=vmem, size = 0x1000, scoped, tag = 'input window, operand 2']
    #allocation8 [shape = 'u8[1024]{0}', space=vmem, size = 0x400, scoped, tag = 'output window, operand 0']
    %8 = vsyncpa [#allocation3], 0
    %s9 = scalar_lea.sflag [#allocation3], 1
    %10 = vsyncpa %s9, 0
    %11 = vsyncpa [#allocation6], 0
    %s12 = scalar_lea.sflag [#allocation6], 1
    %13 = vsyncpa %s12, 0
    %14 = vsyncpa [#allocation4], 0
    %s15 = scalar_lea.sflag [#allocation4], 1
    %16 = vsyncpa %s15, 0
    loop: start=0, step=1, limit=4
    $region2: #{tpu_custom_call.1} parent=1 // loop_pre_header
      _
    $region3: #{tpu_custom_call.1} parent=1 // loop_header
      %s18 = sphi 0, %s22
      %p19 = scmp.ge.s32.totalorder %s18, 4
      %s28 = sphi 0, %s30
      %s31 = sphi 0, %s28
      %s32 = sphi 0, %s31
      %s48 = sphi 0, %s32
      %s54 = sphi 0, %s56
      %s57 = sphi 0, %s54
      %s58 = sphi 0, %s57
      %s74 = sphi 0, %s58
      %s80 = sphi 0, %s82
      %s83 = sphi 0, %s80
      %s84 = sphi 0, %s83
      %s100 = sphi 0, %s84
      %s106 = sphi 0, %s108
      %s109 = sphi 0, %s106
      %s110 = sphi 0, %s109
      %s126 = sphi 0, %s110
    $region4: #{tpu_custom_call.1} parent=1 // loop_header_branch
      %21 = sbr.rel (%p19) target = $region8
    $region5: #{tpu_custom_call.1} parent=1 // loop_body
      %s23 = ssub.s32 %s18, 1
      %s24 = ssub.s32 %s18, 2
      %s25 = sadd.s32 %s18, 1
      %s26 = ssub.s32 %s18, %s25
      %p27 = scmp.eq.s32.totalorder %s26, 0
      %s29 = sadd.s32 %s28, 1
      %s30 = scalar_select %p27, %s28, %s29
      %p33 = pneg %p27
      %p34 = scmp.eq.s32.totalorder %s18, 1
      %p35 = por %p33, %p34
      %p36 = scmp.ne.s32.totalorder %s28, %s31
      %p37 = scmp.eq.s32.totalorder %s18, 0
      %p38 = por %p36, %p37
      %p39 = scmp.ne.s32.totalorder %s28, %s31
      %p40 = scmp.eq.s32.totalorder %s23, 1
      %p41 = por %p39, %p40
      %p42 = scmp.ne.s32.totalorder %s31, %s32
      %p43 = scmp.eq.s32.totalorder %s23, 0
      %p44 = por %p42, %p43
      %p45 = scmp.ne.s32.totalorder %s31, %s32
      %p46 = scmp.eq.s32.totalorder %s24, 1
      %p47 = por %p45, %p46
      %p49 = scmp.ne.s32.totalorder %s32, %s48
      %p50 = scmp.eq.s32.totalorder %s24, 0
      %p51 = por %p49, %p50
      %s52 = ssub.s32 %s18, %s25
      %p53 = scmp.eq.s32.totalorder %s52, 0
      %s55 = sadd.s32 %s54, 1
      %s56 = scalar_select %p53, %s54, %s55
      %p59 = pneg %p53
      %p60 = scmp.eq.s32.totalorder %s18, 1
      %p61 = por %p59, %p60
      %p62 = scmp.ne.s32.totalorder %s54, %s57
      %p63 = scmp.eq.s32.totalorder %s18, 0
      %p64 = por %p62, %p63
      %p65 = scmp.ne.s32.totalorder %s54, %s57
      %p66 = scmp.eq.s32.totalorder %s23, 1
      %p67 = por %p65, %p66
      %p68 = scmp.ne.s32.totalorder %s57, %s58
      %p69 = scmp.eq.s32.totalorder %s23, 0
      %p70 = por %p68, %p69
      %p71 = scmp.ne.s32.totalorder %s57, %s58
      %p72 = scmp.eq.s32.totalorder %s24, 1
      %p73 = por %p71, %p72
      %p75 = scmp.ne.s32.totalorder %s58, %s74
      %p76 = scmp.eq.s32.totalorder %s24, 0
      %p77 = por %p75, %p76
      %s78 = ssub.s32 %s18, %s25
      %p79 = scmp.eq.s32.totalorder %s78, 0
      %s81 = sadd.s32 %s80, 1
      %s82 = scalar_select %p79, %s80, %s81
      %p85 = pneg %p79
      %p86 = scmp.eq.s32.totalorder %s18, 1
      %p87 = por %p85, %p86
      %p88 = scmp.ne.s32.totalorder %s80, %s83
      %p89 = scmp.eq.s32.totalorder %s18, 0
      %p90 = por %p88, %p89
      %p91 = scmp.ne.s32.totalorder %s80, %s83
      %p92 = scmp.eq.s32.totalorder %s23, 1
      %p93 = por %p91, %p92
      %p94 = scmp.ne.s32.totalorder %s83, %s84
      %p95 = scmp.eq.s32.totalorder %s23, 0
      %p96 = por %p94, %p95
      %p97 = scmp.ne.s32.totalorder %s83, %s84
      %p98 = scmp.eq.s32.totalorder %s24, 1
      %p99 = por %p97, %p98
      %p101 = scmp.ne.s32.totalorder %s84, %s100
      %p102 = scmp.eq.s32.totalorder %s24, 0
      %p103 = por %p101, %p102
      %s104 = ssub.s32 %s18, %s25
      %p105 = scmp.eq.s32.totalorder %s104, 0
      %s107 = sadd.s32 %s106, 1
      %s108 = scalar_select %p105, %s106, %s107
      %p111 = pneg %p105
      %p112 = scmp.eq.s32.totalorder %s18, 1
      %p113 = por %p111, %p112
      %p114 = scmp.ne.s32.totalorder %s106, %s109
      %p115 = scmp.eq.s32.totalorder %s18, 0
      %p116 = por %p114, %p115
      %p117 = scmp.ne.s32.totalorder %s106, %s109
      %p118 = scmp.eq.s32.totalorder %s23, 1
      %p119 = por %p117, %p118
      %p120 = scmp.ne.s32.totalorder %s109, %s110
      %p121 = scmp.eq.s32.totalorder %s23, 0
      %p122 = por %p120, %p121
      %p123 = scmp.ne.s32.totalorder %s109, %s110
      %p124 = scmp.eq.s32.totalorder %s24, 1
      %p125 = por %p123, %p124
      %p127 = scmp.ne.s32.totalorder %s110, %s126
      %p128 = scmp.eq.s32.totalorder %s24, 0
      %p129 = por %p127, %p128
      %p130 = scmp.le.s32.totalorder 1, %s18
      %p131 = scmp.lt.s32.totalorder %s18, 3
      %p132 = pnand %p130, %p131
      %p133 = pneg %p132
      // Predicated region
      $region9: #{tpu_custom_call.1} parent=5 // pred_check
        _
      $region10: #{tpu_custom_call.1} parent=5 // pred_check_branch
        %135 = sbr.rel (%p132) target = $region12
      $region11: #{tpu_custom_call.1} parent=5 // pred_region
        %s136 = ssub.s32 %s18, 1
      $region12: #{tpu_custom_call.1} parent=5 // pred_fallthru
        _
      %p137 = scmp.lt.s32.totalorder %s18, 2
      // Predicated region
      $region13: #{tpu_custom_call.1} parent=5 // pred_check
        %p138 = pneg %p137
      $region14: #{tpu_custom_call.1} parent=5 // pred_check_branch
        %140 = sbr.rel (%p138) target = $region16
      $region15: #{tpu_custom_call.1} parent=5 // pred_region
        // Predicated region
        $region17: #{tpu_custom_call.1} parent=15 // pred_check
          %p141 = pneg %p38
        $region18: #{tpu_custom_call.1} parent=15 // pred_check_branch
          %143 = sbr.rel (%p141) target = $region20
        $region19: #{tpu_custom_call.1} parent=15 // pred_region
          %s144 = sand.u32 %s28, 1
          %s145 = scalar_lea.sflag [#allocation3], %s144
          %s146 = sand.u32 %s28, 1
          %s147 = smul.addr %s146, 128
          %s148 = scalar_lea.vmem [#allocation2], %s147
          %150 = vsyncadd %s145, 0
          %s151 = smul.addr %s18, 16
          %s152 = smul.addr %s151, 8
          %s153 = scalar_lea.hbm %s0, %s152
          %s154 = sshll.u32 %s153, 4
          %s155 = int_to_ptr.hbm [resolvable:$true] %s154
          %s156 = sshll.u32 %s148, 4
          %s157 = int_to_ptr.vmem [resolvable:$true] %s156
          %162 = dma.hbm_to_vmem [thread:$0]  %s155, 2048, %s157, %s145, 128, 128, 8
        $region20: #{tpu_custom_call.1} parent=15 // pred_fallthru
          _
        // Predicated region
        $region21: #{tpu_custom_call.1} parent=15 // pred_check
          %p163 = pneg %p64
        $region22: #{tpu_custom_call.1} parent=15 // pred_check_branch
          %165 = sbr.rel (%p163) target = $region24
        $region23: #{tpu_custom_call.1} parent=15 // pred_region
          %s166 = sand.u32 %s18, 1
          %s167 = scalar_lea.sflag [#allocation6], %s166
          %s168 = sand.u32 %s54, 1
          %s169 = smul.addr %s168, 128
          %s170 = scalar_lea.vmem [#allocation5], %s169
          %172 = vsyncadd %s167, 0
          %s173 = smul.addr %s18, 16
          %s174 = smul.addr %s173, 8
          %s175 = scalar_lea.hbm %s1, %s174
          %s176 = sshll.u32 %s175, 4
          %s177 = int_to_ptr.hbm [resolvable:$true] %s176
          %s178 = sshll.u32 %s170, 4
          %s179 = int_to_ptr.vmem [resolvable:$true] %s178
          %184 = dma.hbm_to_vmem [thread:$0]  %s177, 2048, %s179, %s167, 128, 128, 8
        $region24: #{tpu_custom_call.1} parent=15 // pred_fallthru
          _
        // Predicated region
        $region25: #{tpu_custom_call.1} parent=15 // pred_check
          %p185 = pneg %p90
        $region26: #{tpu_custom_call.1} parent=15 // pred_check_branch
          %187 = sbr.rel (%p185) target = $region28
        $region27: #{tpu_custom_call.1} parent=15 // pred_region
          %s188 = sand.u32 %s18, 1
          %s189 = scalar_lea.sflag [#allocation6], %s188
          %s190 = sand.u32 %s80, 1
          %s191 = smul.addr %s190, 4
          %s192 = scalar_lea.vmem [#allocation7], %s191
          %194 = vsyncadd %s189, 0
          %s195 = smul.addr %s18, 2
          %s196 = smul.addr %s195, 2
          %s197 = scalar_lea.hbm %s2, %s196
          %s199 = sshll.u32 %s197, 4
          %s200 = int_to_ptr.hbm [resolvable:$true] %s199
          %s201 = sshll.u32 %s192, 4
          %s202 = int_to_ptr.vmem [resolvable:$true] %s201
          %204 = dma.hbm_to_vmem [thread:$0]  %s200, 64, %s202, %s189
        $region28: #{tpu_custom_call.1} parent=15 // pred_fallthru
          _
      $region16: #{tpu_custom_call.1} parent=5 // pred_fallthru
        _
      %p205 = scmp.le.s32.totalorder 1, %s18
      %p206 = scmp.lt.s32.totalorder %s18, 3
      %p207 = pnand %p205, %p206
      %p208 = pneg %p207
      // Predicated region
      $region29: #{tpu_custom_call.1} parent=5 // pred_check
        _
      $region30: #{tpu_custom_call.1} parent=5 // pred_check_branch
        %210 = sbr.rel (%p207) target = $region32
      $region31: #{tpu_custom_call.1} parent=5 // pred_region
        %s211 = ssub.s32 %s18, 1
        %s212 = sand.u32 %s31, 1
        %s213 = scalar_lea.sflag [#allocation3], %s212
        %s214 = sand.u32 %s31, 1
        %s215 = smul.addr %s214, 128
        %s216 = scalar_lea.vmem [#allocation2], %s215
        // Predicated region
        $region33: #{tpu_custom_call.1} parent=31 // pred_check
          %p217 = pneg %p44
        $region34: #{tpu_custom_call.1} parent=31 // pred_check_branch
          %219 = sbr.rel (%p217) target = $region36
        $region35: #{tpu_custom_call.1} parent=31 // pred_region
          %221 = dma.done %s213, 2048
        $region36: #{tpu_custom_call.1} parent=31 // pred_fallthru
          _
        %s222 = sand.u32 %s23, 1
        %s223 = scalar_lea.sflag [#allocation6], %s222
        %s224 = sand.u32 %s57, 1
        %s225 = smul.addr %s224, 128
        %s226 = scalar_lea.vmem [#allocation5], %s225
        // Predicated region
        $region37: #{tpu_custom_call.1} parent=31 // pred_check
          %p227 = pneg %p70
        $region38: #{tpu_custom_call.1} parent=31 // pred_check_branch
          %229 = sbr.rel (%p227) target = $region40
        $region39: #{tpu_custom_call.1} parent=31 // pred_region
          %231 = dma.done %s223, 2048
        $region40: #{tpu_custom_call.1} parent=31 // pred_fallthru
          _
        %s232 = sand.u32 %s23, 1
        %s233 = scalar_lea.sflag [#allocation6], %s232
        %s234 = sand.u32 %s83, 1
        %s235 = smul.addr %s234, 4
        %s236 = scalar_lea.vmem [#allocation7], %s235
        // Predicated region
        $region41: #{tpu_custom_call.1} parent=31 // pred_check
          %p237 = pneg %p96
        $region42: #{tpu_custom_call.1} parent=31 // pred_check_branch
          %239 = sbr.rel (%p237) target = $region44
        $region43: #{tpu_custom_call.1} parent=31 // pred_region
          %241 = dma.done %s233, 64
        $region44: #{tpu_custom_call.1} parent=31 // pred_fallthru
          _
        %s242 = sand.u32 %s31, 1
        %s243 = scalar_lea.sflag [#allocation3], %s242
        %s244 = sand.u32 %s31, 1
        %s245 = smul.addr %s244, 128
        %s246 = scalar_lea.vmem [#allocation2], %s245
        %p247 = pneg %p44
        %p248 = pneg %p41
        %s249 = sand.u32 %s23, 1
        %s250 = scalar_lea.sflag [#allocation6], %s249
        %s251 = sand.u32 %s57, 1
        %s252 = smul.addr %s251, 128
        %s253 = scalar_lea.vmem [#allocation5], %s252
        %p254 = pneg %p70
        %p255 = pneg %p67
        %s256 = sand.u32 %s23, 1
        %s257 = scalar_lea.sflag [#allocation6], %s256
        %s258 = sand.u32 %s83, 1
        %s259 = smul.addr %s258, 4
        %s260 = scalar_lea.vmem [#allocation7], %s259
        %p261 = pneg %p96
        %p262 = pneg %p93
        %p263 = pneg %p122
        %p264 = pneg %p119
        %s265 = sand.u32 %s109, 1
        %s266 = scalar_lea.sflag [#allocation4], %s265
        %s267 = sand.u32 %s109, 1
        %s268 = scalar_lea.vmem [#allocation8], %s267
        %v269 = vld [vmem:[%s216] sm:$0xff]
        %v270 = vld [vmem:[%s216 + $0x8] sm:$0xff]
        %v271 = vld [vmem:[%s216 + $0x10] sm:$0xff]
        %v272 = vld [vmem:[%s216 + $0x18] sm:$0xff]
        %v273 = vld [vmem:[%s216 + $0x20] sm:$0xff]
        %v274 = vld [vmem:[%s216 + $0x28] sm:$0xff]
        %v275 = vld [vmem:[%s216 + $0x30] sm:$0xff]
        %v276 = vld [vmem:[%s216 + $0x38] sm:$0xff]
        %v277 = vld [vmem:[%s216 + $0x40] sm:$0xff]
        %v278 = vld [vmem:[%s216 + $0x48] sm:$0xff]
        %v279 = vld [vmem:[%s216 + $0x50] sm:$0xff]
        %v280 = vld [vmem:[%s216 + $0x58] sm:$0xff]
        %v281 = vld [vmem:[%s216 + $0x60] sm:$0xff]
        %v282 = vld [vmem:[%s216 + $0x68] sm:$0xff]
        %v283 = vld [vmem:[%s216 + $0x70] sm:$0xff]
        %v284 = vld [vmem:[%s216 + $0x78] sm:$0xff]
        %v285 = vld [vmem:[%s226] sm:$0xff]
        %v286 = vld [vmem:[%s226 + $0x8] sm:$0xff]
        %v287 = vld [vmem:[%s226 + $0x10] sm:$0xff]
        %v288 = vld [vmem:[%s226 + $0x18] sm:$0xff]
        %v289 = vld [vmem:[%s226 + $0x20] sm:$0xff]
        %v290 = vld [vmem:[%s226 + $0x28] sm:$0xff]
        %v291 = vld [vmem:[%s226 + $0x30] sm:$0xff]
        %v292 = vld [vmem:[%s226 + $0x38] sm:$0xff]
        %v293 = vld [vmem:[%s226 + $0x40] sm:$0xff]
        %v294 = vld [vmem:[%s226 + $0x48] sm:$0xff]
        %v295 = vld [vmem:[%s226 + $0x50] sm:$0xff]
        %v296 = vld [vmem:[%s226 + $0x58] sm:$0xff]
        %v297 = vld [vmem:[%s226 + $0x60] sm:$0xff]
        %v298 = vld [vmem:[%s226 + $0x68] sm:$0xff]
        %v299 = vld [vmem:[%s226 + $0x70] sm:$0xff]
        %v300 = vld [vmem:[%s226 + $0x78] sm:$0xff]
        %v301 = vmax.f32 %v269, %v273
        %v302 = vmax.f32 %v270, %v274
        %v303 = vmax.f32 %v271, %v275
        %v304 = vmax.f32 %v272, %v276
        %v305 = vmax.f32 %v301, %v277
        %v306 = vmax.f32 %v302, %v278
        %v307 = vmax.f32 %v303, %v279
        %v308 = vmax.f32 %v304, %v280
        %v309 = vmax.f32 %v305, %v281
        %v310 = vmax.f32 %v306, %v282
        %v311 = vmax.f32 %v307, %v283
        %v312 = vmax.f32 %v308, %v284
        %v313 = vmax.f32 %v309, %v310
        %v314 = vmax.f32 %v311, %v312
        %v315 = vmax.f32 %v313, %v314
        %316 = vmax.xlane.f32.xlu0 %v315
        %v317 = vpop.xlane.xlu0 %316
        %v318 = vrot.slane %v317, 4
        %v319 = vmax.f32 %v317, %v318
        %v320 = vrot.slane %v319, 2
        %v321 = vmax.f32 %v319, %v320
        %v322 = vrot.slane %v321, 1
        %v323 = vmax.f32 %v321, %v322
        %s324 = vtos %v323
        %v325 = vstv %s324
        %v326 = vrcp.pop %v325
        %v327 = vmul.f32 %v325, %v326
        %v328 = vsub.f32 1.0, %v327
        %v329 = vmul.f32 %v326, %v328
        %v330 = vadd.f32 %v326, %v329
        %vm331 = vweird.f32 %v325
        %vm332 = vweird.f32 %v326
        %vm333 = vmor %vm331, %vm332
        %v334 = vsel %vm333, %v326, %v330
        %v335 = vand.u32 2147483647, %v325
        %vm336 = vcmp.eq.f32.partialorder %v335, 8.507059e+37
        %v337 = vand.u32 %v325, 2147483648
        %v338 = vor.u32 1.1754944e-38, %v337
        %v339 = vsel %vm336, %v338, %v334
        %s340 = vtos %v339
        %v341 = vmax.f32 %v285, %v289
        %v342 = vmax.f32 %v286, %v290
        %v343 = vmax.f32 %v287, %v291
        %v344 = vmax.f32 %v288, %v292
        %v345 = vmax.f32 %v341, %v293
        %v346 = vmax.f32 %v342, %v294
        %v347 = vmax.f32 %v343, %v295
        %v348 = vmax.f32 %v344, %v296
        %v349 = vmax.f32 %v345, %v297
        %v350 = vmax.f32 %v346, %v298
        %v351 = vmax.f32 %v347, %v299
        %v352 = vmax.f32 %v348, %v300
        %v353 = vmax.f32 %v349, %v350
        %v354 = vmax.f32 %v351, %v352
        %v355 = vmax.f32 %v353, %v354
        %356 = vmax.xlane.f32.xlu0 %v355
        %v357 = vpop.xlane.xlu0 %356
        %v358 = vrot.slane %v357, 4
        %v359 = vmax.f32 %v357, %v358
        %v360 = vrot.slane %v359, 2
        %v361 = vmax.f32 %v359, %v360
        %v362 = vrot.slane %v361, 1
        %v363 = vmax.f32 %v361, %v362
        %s364 = vtos %v363
        %v365 = vstv %s364
        %v366 = vrcp.pop %v365
        %v367 = vmul.f32 %v365, %v366
        %v368 = vsub.f32 1.0, %v367
        %v369 = vmul.f32 %v366, %v368
        %v370 = vadd.f32 %v366, %v369
        %vm371 = vweird.f32 %v365
        %vm372 = vweird.f32 %v366
        %vm373 = vmor %vm371, %vm372
        %v374 = vsel %vm373, %v366, %v370
        %v375 = vand.u32 2147483647, %v365
        %vm376 = vcmp.eq.f32.partialorder %v375, 8.507059e+37
        %v377 = vand.u32 %v365, 2147483648
        %v378 = vor.u32 1.1754944e-38, %v377
        %v379 = vsel %vm376, %v378, %v374
        %s380 = vtos %v379
        %v381 = vstv %s340
        %v382 = vmul.f32 %v269, %v381
        %v383 = vmul.f32 %v270, %v381
        %v384 = vmul.f32 %v271, %v381
        %v385 = vmul.f32 %v272, %v381
        %v386 = vmul.f32 %v273, %v381
        %v387 = vmul.f32 %v274, %v381
        %v388 = vmul.f32 %v275, %v381
        %v389 = vmul.f32 %v276, %v381
        %v390 = vmul.f32 %v277, %v381
        %v391 = vmul.f32 %v278, %v381
        %v392 = vmul.f32 %v279, %v381
        %v393 = vmul.f32 %v280, %v381
        %v394 = vmul.f32 %v281, %v381
        %v395 = vmul.f32 %v282, %v381
        %v396 = vmul.f32 %v283, %v381
        %v397 = vmul.f32 %v284, %v381
        %v398 = vstv %s380
        %v399 = vmul.f32 %v285, %v398
        %v400 = vmul.f32 %v286, %v398
        %v401 = vmul.f32 %v287, %v398
        %v402 = vmul.f32 %v288, %v398
        %v403 = vmul.f32 %v289, %v398
        %v404 = vmul.f32 %v290, %v398
        %v405 = vmul.f32 %v291, %v398
        %v406 = vmul.f32 %v292, %v398
        %v407 = vmul.f32 %v293, %v398
        %v408 = vmul.f32 %v294, %v398
        %v409 = vmul.f32 %v295, %v398
        %v410 = vmul.f32 %v296, %v398
        %v411 = vmul.f32 %v297, %v398
        %v412 = vmul.f32 %v298, %v398
        %v413 = vmul.f32 %v299, %v398
        %v414 = vmul.f32 %v300, %v398
        %v415 = vsub.f32 %v382, %v399
        %v416 = vsub.f32 %v383, %v400
        %v417 = vsub.f32 %v384, %v401
        %v418 = vsub.f32 %v385, %v402
        %v419 = vsub.f32 %v386, %v403
        %v420 = vsub.f32 %v387, %v404
        %v421 = vsub.f32 %v388, %v405
        %v422 = vsub.f32 %v389, %v406
        %v423 = vsub.f32 %v390, %v407
        %v424 = vsub.f32 %v391, %v408
        %v425 = vsub.f32 %v392, %v409
        %v426 = vsub.f32 %v393, %v410
        %v427 = vsub.f32 %v394, %v411
        %v428 = vsub.f32 %v395, %v412
        %v429 = vsub.f32 %v396, %v413
        %v430 = vsub.f32 %v397, %v414
        %v431 = vld [vmem:[%s236] sm:$0xf]
        %v432 = vlaneseq
        %v433 = vshrl.u32 %v432, 7
        %v434 = vadd.s32 %v433, 8
        %v435 = vadd.s32 %v433, 16
        %v436 = vadd.s32 %v433, 24
        %v437 = vadd.s32 %v433, 32
        %v438 = vadd.s32 %v433, 40
        %v439 = vadd.s32 %v433, 48
        %v440 = vadd.s32 %v433, 56
        %v441 = vadd.s32 %v433, 64
        %v442 = vadd.s32 %v433, 72
        %v443 = vadd.s32 %v433, 80
        %v444 = vadd.s32 %v433, 88
        %v445 = vadd.s32 %v433, 96
        %v446 = vadd.s32 %v433, 104
        %v447 = vadd.s32 %v433, 112
        %v448 = vadd.s32 %v433, 120
        %v449 = vperm.slane %v431, 0
        %v450 = vperm.slane %v431, 2
        %v451 = vperm.slane %v449, 0
        %v452 = vperm.slane %v450, 0
        %vm453 = vcmp.eq.s32.totalorder %v433, %v451
        %vm454 = vcmp.eq.s32.totalorder %v433, %v452
        %vm455 = vcmp.eq.s32.totalorder %v434, %v451
        %vm456 = vcmp.eq.s32.totalorder %v434, %v452
        %vm457 = vcmp.eq.s32.totalorder %v435, %v451
        %vm458 = vcmp.eq.s32.totalorder %v435, %v452
        %vm459 = vcmp.eq.s32.totalorder %v436, %v451
        %vm460 = vcmp.eq.s32.totalorder %v436, %v452
        %vm461 = vcmp.eq.s32.totalorder %v437, %v451
        %vm462 = vcmp.eq.s32.totalorder %v437, %v452
        %vm463 = vcmp.eq.s32.totalorder %v438, %v451
        %vm464 = vcmp.eq.s32.totalorder %v438, %v452
        %vm465 = vcmp.eq.s32.totalorder %v439, %v451
        %vm466 = vcmp.eq.s32.totalorder %v439, %v452
        %vm467 = vcmp.eq.s32.totalorder %v440, %v451
        %vm468 = vcmp.eq.s32.totalorder %v440, %v452
        %vm469 = vcmp.eq.s32.totalorder %v441, %v451
        %vm470 = vcmp.eq.s32.totalorder %v441, %v452
        %vm471 = vcmp.eq.s32.totalorder %v442, %v451
        %vm472 = vcmp.eq.s32.totalorder %v442, %v452
        %vm473 = vcmp.eq.s32.totalorder %v443, %v451
        %vm474 = vcmp.eq.s32.totalorder %v443, %v452
        %vm475 = vcmp.eq.s32.totalorder %v444, %v451
        %vm476 = vcmp.eq.s32.totalorder %v444, %v452
        %vm477 = vcmp.eq.s32.totalorder %v445, %v451
        %vm478 = vcmp.eq.s32.totalorder %v445, %v452
        %vm479 = vcmp.eq.s32.totalorder %v446, %v451
        %vm480 = vcmp.eq.s32.totalorder %v446, %v452
        %vm481 = vcmp.eq.s32.totalorder %v447, %v451
        %vm482 = vcmp.eq.s32.totalorder %v447, %v452
        %vm483 = vcmp.eq.s32.totalorder %v448, %v451
        %vm484 = vcmp.eq.s32.totalorder %v448, %v452
        %v485 = vsel %vm453, 1, 0
        %v486 = vsel %vm454, 1, 0
        %v487 = vsel %vm455, 1, 0
        %v488 = vsel %vm456, 1, 0
        %v489 = vsel %vm457, 1, 0
        %v490 = vsel %vm458, 1, 0
        %v491 = vsel %vm459, 1, 0
        %v492 = vsel %vm460, 1, 0
        %v493 = vsel %vm461, 1, 0
        %v494 = vsel %vm462, 1, 0
        %v495 = vsel %vm463, 1, 0
        %v496 = vsel %vm464, 1, 0
        %v497 = vsel %vm465, 1, 0
        %v498 = vsel %vm466, 1, 0
        %v499 = vsel %vm467, 1, 0
        %v500 = vsel %vm468, 1, 0
        %v501 = vsel %vm469, 1, 0
        %v502 = vsel %vm470, 1, 0
        %v503 = vsel %vm471, 1, 0
        %v504 = vsel %vm472, 1, 0
        %v505 = vsel %vm473, 1, 0
        %v506 = vsel %vm474, 1, 0
        %v507 = vsel %vm475, 1, 0
        %v508 = vsel %vm476, 1, 0
        %v509 = vsel %vm477, 1, 0
        %v510 = vsel %vm478, 1, 0
        %v511 = vsel %vm479, 1, 0
        %v512 = vsel %vm480, 1, 0
        %v513 = vsel %vm481, 1, 0
        %v514 = vsel %vm482, 1, 0
        %v515 = vsel %vm483, 1, 0
        %v516 = vsel %vm484, 1, 0
        %v517 = vcvt.s32.f32 %v485
        %v518 = vcvt.s32.f32 %v486
        %v519 = vcvt.s32.f32 %v487
        %v520 = vcvt.s32.f32 %v488
        %v521 = vcvt.s32.f32 %v489
        %v522 = vcvt.s32.f32 %v490
        %v523 = vcvt.s32.f32 %v491
        %v524 = vcvt.s32.f32 %v492
        %v525 = vcvt.s32.f32 %v493
        %v526 = vcvt.s32.f32 %v494
        %v527 = vcvt.s32.f32 %v495
        %v528 = vcvt.s32.f32 %v496
        %v529 = vcvt.s32.f32 %v497
        %v530 = vcvt.s32.f32 %v498
        %v531 = vcvt.s32.f32 %v499
        %v532 = vcvt.s32.f32 %v500
        %v533 = vcvt.s32.f32 %v501
        %v534 = vcvt.s32.f32 %v502
        %v535 = vcvt.s32.f32 %v503
        %v536 = vcvt.s32.f32 %v504
        %v537 = vcvt.s32.f32 %v505
        %v538 = vcvt.s32.f32 %v506
        %v539 = vcvt.s32.f32 %v507
        %v540 = vcvt.s32.f32 %v508
        %v541 = vcvt.s32.f32 %v509
        %v542 = vcvt.s32.f32 %v510
        %v543 = vcvt.s32.f32 %v511
        %v544 = vcvt.s32.f32 %v512
        %v545 = vcvt.s32.f32 %v513
        %v546 = vcvt.s32.f32 %v514
        %v547 = vcvt.s32.f32 %v515
        %v548 = vcvt.s32.f32 %v516
        %v549 = vand.u32 %v547, 4294901760
        %550 = vmatpush.msra.mxu0 %v549
        %v551 = vand.u32 %v545, 4294901760
        %552 = vmatpush.msra.mxu0 %v551
        %v553 = vand.u32 %v543, 4294901760
        %554 = vmatpush.msra.mxu0 %v553
        %v555 = vand.u32 %v541, 4294901760
        %556 = vmatpush.msra.mxu0 %v555
        %v557 = vand.u32 %v539, 4294901760
        %558 = vmatpush.msra.mxu0 %v557
        %v559 = vand.u32 %v537, 4294901760
        %560 = vmatpush.msra.mxu0 %v559
        %v561 = vand.u32 %v535, 4294901760
        %562 = vmatpush.msra.mxu0 %v561
        %v563 = vand.u32 %v533, 4294901760
        %564 = vmatpush.msra.mxu0 %v563
        %v565 = vand.u32 %v531, 4294901760
        %566 = vmatpush.msra.mxu0 %v565
        %v567 = vand.u32 %v529, 4294901760
        %568 = vmatpush.msra.mxu0 %v567
        %v569 = vand.u32 %v527, 4294901760
        %570 = vmatpush.msra.mxu0 %v569
        %v571 = vand.u32 %v525, 4294901760
        %572 = vmatpush.msra.mxu0 %v571
        %v573 = vand.u32 %v523, 4294901760
        %574 = vmatpush.msra.mxu0 %v573
        %v575 = vand.u32 %v521, 4294901760
        %576 = vmatpush.msra.mxu0 %v575
        %v577 = vand.u32 %v519, 4294901760
        %578 = vmatpush.msra.mxu0 %v577
        %v579 = vand.u32 %v517, 4294901760
        %580 = vmatpush.msra.mxu0 %v579
        %v581 = vand.u32 %v415, 4294901760
        %v582 = vsub.f32 %v415, %v581
        %v583 = vand.u32 %v582, 4294901760
        %v584 = vsub.f32 %v582, %v583
        %v585 = vand.u32 %v584, 4294901760
        %586 = vmatmul.f32.gmra.mxu0 %v585
        %v587 = vpop.f32.mrf.mxu0
        %v588 = vadd.f32 0.0, %v587
        %v589 = vand.u32 %v416, 4294901760
        %v590 = vsub.f32 %v416, %v589
        %v591 = vand.u32 %v590, 4294901760
        %v592 = vsub.f32 %v590, %v591
        %v593 = vand.u32 %v592, 4294901760
        %594 = vmatmul.f32.gmra.mxu0 %v593
        %v595 = vpop.f32.mrf.mxu0
        %v596 = vadd.f32 0.0, %v595
        %v597 = vand.u32 %v417, 4294901760
        %v598 = vsub.f32 %v417, %v597
        %v599 = vand.u32 %v598, 4294901760
        %v600 = vsub.f32 %v598, %v599
        %v601 = vand.u32 %v600, 4294901760
        %602 = vmatmul.f32.gmra.mxu0 %v601
        %v603 = vpop.f32.mrf.mxu0
        %v604 = vadd.f32 0.0, %v603
        %v605 = vand.u32 %v418, 4294901760
        %v606 = vsub.f32 %v418, %v605
        %v607 = vand.u32 %v606, 4294901760
        %v608 = vsub.f32 %v606, %v607
        %v609 = vand.u32 %v608, 4294901760
        %610 = vmatmul.f32.gmra.mxu0 %v609
        %v611 = vpop.f32.mrf.mxu0
        %v612 = vadd.f32 0.0, %v611
        %v613 = vand.u32 %v419, 4294901760
        %v614 = vsub.f32 %v419, %v613
        %v615 = vand.u32 %v614, 4294901760
        %v616 = vsub.f32 %v614, %v615
        %v617 = vand.u32 %v616, 4294901760
        %618 = vmatmul.f32.gmra.mxu0 %v617
        %v619 = vpop.f32.mrf.mxu0
        %v620 = vadd.f32 0.0, %v619
        %v621 = vand.u32 %v420, 4294901760
        %v622 = vsub.f32 %v420, %v621
        %v623 = vand.u32 %v622, 4294901760
        %v624 = vsub.f32 %v622, %v623
        %v625 = vand.u32 %v624, 4294901760
        %626 = vmatmul.f32.gmra.mxu0 %v625
        %v627 = vpop.f32.mrf.mxu0
        %v628 = vadd.f32 0.0, %v627
        %v629 = vand.u32 %v421, 4294901760
        %v630 = vsub.f32 %v421, %v629
        %v631 = vand.u32 %v630, 4294901760
        %v632 = vsub.f32 %v630, %v631
        %v633 = vand.u32 %v632, 4294901760
        %634 = vmatmul.f32.gmra.mxu0 %v633
        %v635 = vpop.f32.mrf.mxu0
        %v636 = vadd.f32 0.0, %v635
        %v637 = vand.u32 %v422, 4294901760
        %v638 = vsub.f32 %v422, %v637
        %v639 = vand.u32 %v638, 4294901760
        %v640 = vsub.f32 %v638, %v639
        %v641 = vand.u32 %v640, 4294901760
        %642 = vmatmul.f32.gmra.mxu0 %v641
        %v643 = vpop.f32.mrf.mxu0
        %v644 = vadd.f32 0.0, %v643
        %v645 = vand.u32 %v423, 4294901760
        %v646 = vsub.f32 %v423, %v645
        %v647 = vand.u32 %v646, 4294901760
        %v648 = vsub.f32 %v646, %v647
        %v649 = vand.u32 %v648, 4294901760
        %650 = vmatmul.f32.gmra.mxu0 %v649
        %v651 = vpop.f32.mrf.mxu0
        %v652 = vadd.f32 0.0, %v651
        %v653 = vand.u32 %v424, 4294901760
        %v654 = vsub.f32 %v424, %v653
        %v655 = vand.u32 %v654, 4294901760
        %v656 = vsub.f32 %v654, %v655
        %v657 = vand.u32 %v656, 4294901760
        %658 = vmatmul.f32.gmra.mxu0 %v657
        %v659 = vpop.f32.mrf.mxu0
        %v660 = vadd.f32 0.0, %v659
        %v661 = vand.u32 %v425, 4294901760
        %v662 = vsub.f32 %v425, %v661
        %v663 = vand.u32 %v662, 4294901760
        %v664 = vsub.f32 %v662, %v663
        %v665 = vand.u32 %v664, 4294901760
        %666 = vmatmul.f32.gmra.mxu0 %v665
        %v667 = vpop.f32.mrf.mxu0
        %v668 = vadd.f32 0.0, %v667
        %v669 = vand.u32 %v426, 4294901760
        %v670 = vsub.f32 %v426, %v669
        %v671 = vand.u32 %v670, 4294901760
        %v672 = vsub.f32 %v670, %v671
        %v673 = vand.u32 %v672, 4294901760
        %674 = vmatmul.f32.gmra.mxu0 %v673
        %v675 = vpop.f32.mrf.mxu0
        %v676 = vadd.f32 0.0, %v675
        %v677 = vand.u32 %v427, 4294901760
        %v678 = vsub.f32 %v427, %v677
        %v679 = vand.u32 %v678, 4294901760
        %v680 = vsub.f32 %v678, %v679
        %v681 = vand.u32 %v680, 4294901760
        %682 = vmatmul.f32.gmra.mxu0 %v681
        %v683 = vpop.f32.mrf.mxu0
        %v684 = vadd.f32 0.0, %v683
        %v685 = vand.u32 %v428, 4294901760
        %v686 = vsub.f32 %v428, %v685
        %v687 = vand.u32 %v686, 4294901760
        %v688 = vsub.f32 %v686, %v687
        %v689 = vand.u32 %v688, 4294901760
        %690 = vmatmul.f32.gmra.mxu0 %v689
        %v691 = vpop.f32.mrf.mxu0
        %v692 = vadd.f32 0.0, %v691
        %v693 = vand.u32 %v429, 4294901760
        %v694 = vsub.f32 %v429, %v693
        %v695 = vand.u32 %v694, 4294901760
        %v696 = vsub.f32 %v694, %v695
        %v697 = vand.u32 %v696, 4294901760
        %698 = vmatmul.f32.gmra.mxu0 %v697
        %v699 = vpop.f32.mrf.mxu0
        %v700 = vadd.f32 0.0, %v699
        %v701 = vand.u32 %v430, 4294901760
        %v702 = vsub.f32 %v430, %v701
        %v703 = vand.u32 %v702, 4294901760
        %v704 = vsub.f32 %v702, %v703
        %v705 = vand.u32 %v704, 4294901760
        %706 = vmatmul.f32.gmra.mxu0 %v705
        %v707 = vpop.f32.mrf.mxu0
        %v708 = vadd.f32 0.0, %v707
        %709 = vdwg.mxu0
        %v710 = vand.u32 %v547, 4294901760
        %v711 = vsub.f32 %v547, %v710
        %v712 = vand.u32 %v711, 4294901760
        %v713 = vsub.f32 %v711, %v712
        %v714 = vand.u32 %v713, 4294901760
        %715 = vmatpush.msra.mxu0 %v714
        %v716 = vand.u32 %v545, 4294901760
        %v717 = vsub.f32 %v545, %v716
        %v718 = vand.u32 %v717, 4294901760
        %v719 = vsub.f32 %v717, %v718
        %v720 = vand.u32 %v719, 4294901760
        %721 = vmatpush.msra.mxu0 %v720
        %v722 = vand.u32 %v543, 4294901760
        %v723 = vsub.f32 %v543, %v722
        %v724 = vand.u32 %v723, 4294901760
        %v725 = vsub.f32 %v723, %v724
        %v726 = vand.u32 %v725, 4294901760
        %727 = vmatpush.msra.mxu0 %v726
        %v728 = vand.u32 %v541, 4294901760
        %v729 = vsub.f32 %v541, %v728
        %v730 = vand.u32 %v729, 4294901760
        %v731 = vsub.f32 %v729, %v730
        %v732 = vand.u32 %v731, 4294901760
        %733 = vmatpush.msra.mxu0 %v732
        %v734 = vand.u32 %v539, 4294901760
        %v735 = vsub.f32 %v539, %v734
        %v736 = vand.u32 %v735, 4294901760
        %v737 = vsub.f32 %v735, %v736
        %v738 = vand.u32 %v737, 4294901760
        %739 = vmatpush.msra.mxu0 %v738
        %v740 = vand.u32 %v537, 4294901760
        %v741 = vsub.f32 %v537, %v740
        %v742 = vand.u32 %v741, 4294901760
        %v743 = vsub.f32 %v741, %v742
        %v744 = vand.u32 %v743, 4294901760
        %745 = vmatpush.msra.mxu0 %v744
        %v746 = vand.u32 %v535, 4294901760
        %v747 = vsub.f32 %v535, %v746
        %v748 = vand.u32 %v747, 4294901760
        %v749 = vsub.f32 %v747, %v748
        %v750 = vand.u32 %v749, 4294901760
        %751 = vmatpush.msra.mxu0 %v750
        %v752 = vand.u32 %v533, 4294901760
        %v753 = vsub.f32 %v533, %v752
        %v754 = vand.u32 %v753, 4294901760
        %v755 = vsub.f32 %v753, %v754
        %v756 = vand.u32 %v755, 4294901760
        %757 = vmatpush.msra.mxu0 %v756
        %v758 = vand.u32 %v531, 4294901760
        %v759 = vsub.f32 %v531, %v758
        %v760 = vand.u32 %v759, 4294901760
        %v761 = vsub.f32 %v759, %v760
        %v762 = vand.u32 %v761, 4294901760
        %763 = vmatpush.msra.mxu0 %v762
        %v764 = vand.u32 %v529, 4294901760
        %v765 = vsub.f32 %v529, %v764
        %v766 = vand.u32 %v765, 4294901760
        %v767 = vsub.f32 %v765, %v766
        %v768 = vand.u32 %v767, 4294901760
        %769 = vmatpush.msra.mxu0 %v768
        %v770 = vand.u32 %v527, 4294901760
        %v771 = vsub.f32 %v527, %v770
        %v772 = vand.u32 %v771, 4294901760
        %v773 = vsub.f32 %v771, %v772
        %v774 = vand.u32 %v773, 4294901760
        %775 = vmatpush.msra.mxu0 %v774
        %v776 = vand.u32 %v525, 4294901760
        %v777 = vsub.f32 %v525, %v776
        %v778 = vand.u32 %v777, 4294901760
        %v779 = vsub.f32 %v777, %v778
        %v780 = vand.u32 %v779, 4294901760
        %781 = vmatpush.msra.mxu0 %v780
        %v782 = vand.u32 %v523, 4294901760
        %v783 = vsub.f32 %v523, %v782
        %v784 = vand.u32 %v783, 4294901760
        %v785 = vsub.f32 %v783, %v784
        %v786 = vand.u32 %v785, 4294901760
        %787 = vmatpush.msra.mxu0 %v786
        %v788 = vand.u32 %v521, 4294901760
        %v789 = vsub.f32 %v521, %v788
        %v790 = vand.u32 %v789, 4294901760
        %v791 = vsub.f32 %v789, %v790
        %v792 = vand.u32 %v791, 4294901760
        %793 = vmatpush.msra.mxu0 %v792
        %v794 = vand.u32 %v519, 4294901760
        %v795 = vsub.f32 %v519, %v794
        %v796 = vand.u32 %v795, 4294901760
        %v797 = vsub.f32 %v795, %v796
        %v798 = vand.u32 %v797, 4294901760
        %799 = vmatpush.msra.mxu0 %v798
        %v800 = vand.u32 %v517, 4294901760
        %v801 = vsub.f32 %v517, %v800
        %v802 = vand.u32 %v801, 4294901760
        %v803 = vsub.f32 %v801, %v802
        %v804 = vand.u32 %v803, 4294901760
        %805 = vmatpush.msra.mxu0 %v804
        %v806 = vand.u32 %v415, 4294901760
        %807 = vmatmul.f32.gmra.mxu0 %v806
        %v808 = vpop.f32.mrf.mxu0
        %v809 = vadd.f32 %v588, %v808
        %v810 = vand.u32 %v416, 4294901760
        %811 = vmatmul.f32.gmra.mxu0 %v810
        %v812 = vpop.f32.mrf.mxu0
        %v813 = vadd.f32 %v596, %v812
        %v814 = vand.u32 %v417, 4294901760
        %815 = vmatmul.f32.gmra.mxu0 %v814
        %v816 = vpop.f32.mrf.mxu0
        %v817 = vadd.f32 %v604, %v816
        %v818 = vand.u32 %v418, 4294901760
        %819 = vmatmul.f32.gmra.mxu0 %v818
        %v820 = vpop.f32.mrf.mxu0
        %v821 = vadd.f32 %v612, %v820
        %v822 = vand.u32 %v419, 4294901760
        %823 = vmatmul.f32.gmra.mxu0 %v822
        %v824 = vpop.f32.mrf.mxu0
        %v825 = vadd.f32 %v620, %v824
        %v826 = vand.u32 %v420, 4294901760
        %827 = vmatmul.f32.gmra.mxu0 %v826
        %v828 = vpop.f32.mrf.mxu0
        %v829 = vadd.f32 %v628, %v828
        %v830 = vand.u32 %v421, 4294901760
        %831 = vmatmul.f32.gmra.mxu0 %v830
        %v832 = vpop.f32.mrf.mxu0
        %v833 = vadd.f32 %v636, %v832
        %v834 = vand.u32 %v422, 4294901760
        %835 = vmatmul.f32.gmra.mxu0 %v834
        %v836 = vpop.f32.mrf.mxu0
        %v837 = vadd.f32 %v644, %v836
        %v838 = vand.u32 %v423, 4294901760
        %839 = vmatmul.f32.gmra.mxu0 %v838
        %v840 = vpop.f32.mrf.mxu0
        %v841 = vadd.f32 %v652, %v840
        %v842 = vand.u32 %v424, 4294901760
        %843 = vmatmul.f32.gmra.mxu0 %v842
        %v844 = vpop.f32.mrf.mxu0
        %v845 = vadd.f32 %v660, %v844
        %v846 = vand.u32 %v425, 4294901760
        %847 = vmatmul.f32.gmra.mxu0 %v846
        %v848 = vpop.f32.mrf.mxu0
        %v849 = vadd.f32 %v668, %v848
        %v850 = vand.u32 %v426, 4294901760
        %851 = vmatmul.f32.gmra.mxu0 %v850
        %v852 = vpop.f32.mrf.mxu0
        %v853 = vadd.f32 %v676, %v852
        %v854 = vand.u32 %v427, 4294901760
        %855 = vmatmul.f32.gmra.mxu0 %v854
        %v856 = vpop.f32.mrf.mxu0
        %v857 = vadd.f32 %v684, %v856
        %v858 = vand.u32 %v428, 4294901760
        %859 = vmatmul.f32.gmra.mxu0 %v858
        %v860 = vpop.f32.mrf.mxu0
        %v861 = vadd.f32 %v692, %v860
        %v862 = vand.u32 %v429, 4294901760
        %863 = vmatmul.f32.gmra.mxu0 %v862
        %v864 = vpop.f32.mrf.mxu0
        %v865 = vadd.f32 %v700, %v864
        %v866 = vand.u32 %v430, 4294901760
        %867 = vmatmul.f32.gmra.mxu0 %v866
        %v868 = vpop.f32.mrf.mxu0
        %v869 = vadd.f32 %v708, %v868
        %870 = vdwg.mxu0
        %v871 = vand.u32 %v547, 4294901760
        %v872 = vsub.f32 %v547, %v871
        %873 = vmatpush.msra.mxu0 %v872
        %v874 = vand.u32 %v545, 4294901760
        %v875 = vsub.f32 %v545, %v874
        %876 = vmatpush.msra.mxu0 %v875
        %v877 = vand.u32 %v543, 4294901760
        %v878 = vsub.f32 %v543, %v877
        %879 = vmatpush.msra.mxu0 %v878
        %v880 = vand.u32 %v541, 4294901760
        %v881 = vsub.f32 %v541, %v880
        %882 = vmatpush.msra.mxu0 %v881
        %v883 = vand.u32 %v539, 4294901760
        %v884 = vsub.f32 %v539, %v883
        %885 = vmatpush.msra.mxu0 %v884
        %v886 = vand.u32 %v537, 4294901760
        %v887 = vsub.f32 %v537, %v886
        %888 = vmatpush.msra.mxu0 %v887
        %v889 = vand.u32 %v535, 4294901760
        %v890 = vsub.f32 %v535, %v889
        %891 = vmatpush.msra.mxu0 %v890
        %v892 = vand.u32 %v533, 4294901760
        %v893 = vsub.f32 %v533, %v892
        %894 = vmatpush.msra.mxu0 %v893
        %v895 = vand.u32 %v531, 4294901760
        %v896 = vsub.f32 %v531, %v895
        %897 = vmatpush.msra.mxu0 %v896
        %v898 = vand.u32 %v529, 4294901760
        %v899 = vsub.f32 %v529, %v898
        %900 = vmatpush.msra.mxu0 %v899
        %v901 = vand.u32 %v527, 4294901760
        %v902 = vsub.f32 %v527, %v901
        %903 = vmatpush.msra.mxu0 %v902
        %v904 = vand.u32 %v525, 4294901760
        %v905 = vsub.f32 %v525, %v904
        %906 = vmatpush.msra.mxu0 %v905
        %v907 = vand.u32 %v523, 4294901760
        %v908 = vsub.f32 %v523, %v907
        %909 = vmatpush.msra.mxu0 %v908
        %v910 = vand.u32 %v521, 4294901760
        %v911 = vsub.f32 %v521, %v910
        %912 = vmatpush.msra.mxu0 %v911
        %v913 = vand.u32 %v519, 4294901760
        %v914 = vsub.f32 %v519, %v913
        %915 = vmatpush.msra.mxu0 %v914
        %v916 = vand.u32 %v517, 4294901760
        %v917 = vsub.f32 %v517, %v916
        %918 = vmatpush.msra.mxu0 %v917
        %v919 = vand.u32 %v415, 4294901760
        %v920 = vsub.f32 %v415, %v919
        %921 = vmatmul.f32.gmra.mxu0 %v920
        %v922 = vpop.f32.mrf.mxu0
        %v923 = vadd.f32 %v809, %v922
        %v924 = vand.u32 %v416, 4294901760
        %v925 = vsub.f32 %v416, %v924
        %926 = vmatmul.f32.gmra.mxu0 %v925
        %v927 = vpop.f32.mrf.mxu0
        %v928 = vadd.f32 %v813, %v927
        %v929 = vand.u32 %v417, 4294901760
        %v930 = vsub.f32 %v417, %v929
        %931 = vmatmul.f32.gmra.mxu0 %v930
        %v932 = vpop.f32.mrf.mxu0
        %v933 = vadd.f32 %v817, %v932
        %v934 = vand.u32 %v418, 4294901760
        %v935 = vsub.f32 %v418, %v934
        %936 = vmatmul.f32.gmra.mxu0 %v935
        %v937 = vpop.f32.mrf.mxu0
        %v938 = vadd.f32 %v821, %v937
        %v939 = vand.u32 %v419, 4294901760
        %v940 = vsub.f32 %v419, %v939
        %941 = vmatmul.f32.gmra.mxu0 %v940
        %v942 = vpop.f32.mrf.mxu0
        %v943 = vadd.f32 %v825, %v942
        %v944 = vand.u32 %v420, 4294901760
        %v945 = vsub.f32 %v420, %v944
        %946 = vmatmul.f32.gmra.mxu0 %v945
        %v947 = vpop.f32.mrf.mxu0
        %v948 = vadd.f32 %v829, %v947
        %v949 = vand.u32 %v421, 4294901760
        %v950 = vsub.f32 %v421, %v949
        %951 = vmatmul.f32.gmra.mxu0 %v950
        %v952 = vpop.f32.mrf.mxu0
        %v953 = vadd.f32 %v833, %v952
        %v954 = vand.u32 %v422, 4294901760
        %v955 = vsub.f32 %v422, %v954
        %956 = vmatmul.f32.gmra.mxu0 %v955
        %v957 = vpop.f32.mrf.mxu0
        %v958 = vadd.f32 %v837, %v957
        %v959 = vand.u32 %v423, 4294901760
        %v960 = vsub.f32 %v423, %v959
        %961 = vmatmul.f32.gmra.mxu0 %v960
        %v962 = vpop.f32.mrf.mxu0
        %v963 = vadd.f32 %v841, %v962
        %v964 = vand.u32 %v424, 4294901760
        %v965 = vsub.f32 %v424, %v964
        %966 = vmatmul.f32.gmra.mxu0 %v965
        %v967 = vpop.f32.mrf.mxu0
        %v968 = vadd.f32 %v845, %v967
        %v969 = vand.u32 %v425, 4294901760
        %v970 = vsub.f32 %v425, %v969
        %971 = vmatmul.f32.gmra.mxu0 %v970
        %v972 = vpop.f32.mrf.mxu0
        %v973 = vadd.f32 %v849, %v972
        %v974 = vand.u32 %v426, 4294901760
        %v975 = vsub.f32 %v426, %v974
        %976 = vmatmul.f32.gmra.mxu0 %v975
        %v977 = vpop.f32.mrf.mxu0
        %v978 = vadd.f32 %v853, %v977
        %v979 = vand.u32 %v427, 4294901760
        %v980 = vsub.f32 %v427, %v979
        %981 = vmatmul.f32.gmra.mxu0 %v980
        %v982 = vpop.f32.mrf.mxu0
        %v983 = vadd.f32 %v857, %v982
        %v984 = vand.u32 %v428, 4294901760
        %v985 = vsub.f32 %v428, %v984
        %986 = vmatmul.f32.gmra.mxu0 %v985
        %v987 = vpop.f32.mrf.mxu0
        %v988 = vadd.f32 %v861, %v987
        %v989 = vand.u32 %v429, 4294901760
        %v990 = vsub.f32 %v429, %v989
        %991 = vmatmul.f32.gmra.mxu0 %v990
        %v992 = vpop.f32.mrf.mxu0
        %v993 = vadd.f32 %v865, %v992
        %v994 = vand.u32 %v430, 4294901760
        %v995 = vsub.f32 %v430, %v994
        %996 = vmatmul.f32.gmra.mxu0 %v995
        %v997 = vpop.f32.mrf.mxu0
        %v998 = vadd.f32 %v869, %v997
        %999 = vdwg.mxu0
        %v1000 = vand.u32 %v547, 4294901760
        %1001 = vmatpush.msra.mxu0 %v1000
        %v1002 = vand.u32 %v545, 4294901760
        %1003 = vmatpush.msra.mxu0 %v1002
        %v1004 = vand.u32 %v543, 4294901760
        %1005 = vmatpush.msra.mxu0 %v1004
        %v1006 = vand.u32 %v541, 4294901760
        %1007 = vmatpush.msra.mxu0 %v1006
        %v1008 = vand.u32 %v539, 4294901760
        %1009 = vmatpush.msra.mxu0 %v1008
        %v1010 = vand.u32 %v537, 4294901760
        %1011 = vmatpush.msra.mxu0 %v1010
        %v1012 = vand.u32 %v535, 4294901760
        %1013 = vmatpush.msra.mxu0 %v1012
        %v1014 = vand.u32 %v533, 4294901760
        %1015 = vmatpush.msra.mxu0 %v1014
        %v1016 = vand.u32 %v531, 4294901760
        %1017 = vmatpush.msra.mxu0 %v1016
        %v1018 = vand.u32 %v529, 4294901760
        %1019 = vmatpush.msra.mxu0 %v1018
        %v1020 = vand.u32 %v527, 4294901760
        %1021 = vmatpush.msra.mxu0 %v1020
        %v1022 = vand.u32 %v525, 4294901760
        %1023 = vmatpush.msra.mxu0 %v1022
        %v1024 = vand.u32 %v523, 4294901760
        %1025 = vmatpush.msra.mxu0 %v1024
        %v1026 = vand.u32 %v521, 4294901760
        %1027 = vmatpush.msra.mxu0 %v1026
        %v1028 = vand.u32 %v519, 4294901760
        %1029 = vmatpush.msra.mxu0 %v1028
        %v1030 = vand.u32 %v517, 4294901760
        %1031 = vmatpush.msra.mxu0 %v1030
        %v1032 = vand.u32 %v415, 4294901760
        %v1033 = vsub.f32 %v415, %v1032
        %v1034 = vand.u32 %v1033, 4294901760
        %1035 = vmatmul.f32.gmra.mxu0 %v1034
        %v1036 = vpop.f32.mrf.mxu0
        %v1037 = vadd.f32 %v923, %v1036
        %v1038 = vand.u32 %v416, 4294901760
        %v1039 = vsub.f32 %v416, %v1038
        %v1040 = vand.u32 %v1039, 4294901760
        %1041 = vmatmul.f32.gmra.mxu0 %v1040
        %v1042 = vpop.f32.mrf.mxu0
        %v1043 = vadd.f32 %v928, %v1042
        %v1044 = vand.u32 %v417, 4294901760
        %v1045 = vsub.f32 %v417, %v1044
        %v1046 = vand.u32 %v1045, 4294901760
        %1047 = vmatmul.f32.gmra.mxu0 %v1046
        %v1048 = vpop.f32.mrf.mxu0
        %v1049 = vadd.f32 %v933, %v1048
        %v1050 = vand.u32 %v418, 4294901760
        %v1051 = vsub.f32 %v418, %v1050
        %v1052 = vand.u32 %v1051, 4294901760
        %1053 = vmatmul.f32.gmra.mxu0 %v1052
        %v1054 = vpop.f32.mrf.mxu0
        %v1055 = vadd.f32 %v938, %v1054
        %v1056 = vand.u32 %v419, 4294901760
        %v1057 = vsub.f32 %v419, %v1056
        %v1058 = vand.u32 %v1057, 4294901760
        %1059 = vmatmul.f32.gmra.mxu0 %v1058
        %v1060 = vpop.f32.mrf.mxu0
        %v1061 = vadd.f32 %v943, %v1060
        %v1062 = vand.u32 %v420, 4294901760
        %v1063 = vsub.f32 %v420, %v1062
        %v1064 = vand.u32 %v1063, 4294901760
        %1065 = vmatmul.f32.gmra.mxu0 %v1064
        %v1066 = vpop.f32.mrf.mxu0
        %v1067 = vadd.f32 %v948, %v1066
        %v1068 = vand.u32 %v421, 4294901760
        %v1069 = vsub.f32 %v421, %v1068
        %v1070 = vand.u32 %v1069, 4294901760
        %1071 = vmatmul.f32.gmra.mxu0 %v1070
        %v1072 = vpop.f32.mrf.mxu0
        %v1073 = vadd.f32 %v953, %v1072
        %v1074 = vand.u32 %v422, 4294901760
        %v1075 = vsub.f32 %v422, %v1074
        %v1076 = vand.u32 %v1075, 4294901760
        %1077 = vmatmul.f32.gmra.mxu0 %v1076
        %v1078 = vpop.f32.mrf.mxu0
        %v1079 = vadd.f32 %v958, %v1078
        %v1080 = vand.u32 %v423, 4294901760
        %v1081 = vsub.f32 %v423, %v1080
        %v1082 = vand.u32 %v1081, 4294901760
        %1083 = vmatmul.f32.gmra.mxu0 %v1082
        %v1084 = vpop.f32.mrf.mxu0
        %v1085 = vadd.f32 %v963, %v1084
        %v1086 = vand.u32 %v424, 4294901760
        %v1087 = vsub.f32 %v424, %v1086
        %v1088 = vand.u32 %v1087, 4294901760
        %1089 = vmatmul.f32.gmra.mxu0 %v1088
        %v1090 = vpop.f32.mrf.mxu0
        %v1091 = vadd.f32 %v968, %v1090
        %v1092 = vand.u32 %v425, 4294901760
        %v1093 = vsub.f32 %v425, %v1092
        %v1094 = vand.u32 %v1093, 4294901760
        %1095 = vmatmul.f32.gmra.mxu0 %v1094
        %v1096 = vpop.f32.mrf.mxu0
        %v1097 = vadd.f32 %v973, %v1096
        %v1098 = vand.u32 %v426, 4294901760
        %v1099 = vsub.f32 %v426, %v1098
        %v1100 = vand.u32 %v1099, 4294901760
        %1101 = vmatmul.f32.gmra.mxu0 %v1100
        %v1102 = vpop.f32.mrf.mxu0
        %v1103 = vadd.f32 %v978, %v1102
        %v1104 = vand.u32 %v427, 4294901760
        %v1105 = vsub.f32 %v427, %v1104
        %v1106 = vand.u32 %v1105, 4294901760
        %1107 = vmatmul.f32.gmra.mxu0 %v1106
        %v1108 = vpop.f32.mrf.mxu0
        %v1109 = vadd.f32 %v983, %v1108
        %v1110 = vand.u32 %v428, 4294901760
        %v1111 = vsub.f32 %v428, %v1110
        %v1112 = vand.u32 %v1111, 4294901760
        %1113 = vmatmul.f32.gmra.mxu0 %v1112
        %v1114 = vpop.f32.mrf.mxu0
        %v1115 = vadd.f32 %v988, %v1114
        %v1116 = vand.u32 %v429, 4294901760
        %v1117 = vsub.f32 %v429, %v1116
        %v1118 = vand.u32 %v1117, 4294901760
        %1119 = vmatmul.f32.gmra.mxu0 %v1118
        %v1120 = vpop.f32.mrf.mxu0
        %v1121 = vadd.f32 %v993, %v1120
        %v1122 = vand.u32 %v430, 4294901760
        %v1123 = vsub.f32 %v430, %v1122
        %v1124 = vand.u32 %v1123, 4294901760
        %1125 = vmatmul.f32.gmra.mxu0 %v1124
        %v1126 = vpop.f32.mrf.mxu0
        %v1127 = vadd.f32 %v998, %v1126
        %1128 = vdwg.mxu0
        %v1129 = vand.u32 %v547, 4294901760
        %v1130 = vsub.f32 %v547, %v1129
        %v1131 = vand.u32 %v1130, 4294901760
        %1132 = vmatpush.msra.mxu0 %v1131
        %v1133 = vand.u32 %v545, 4294901760
        %v1134 = vsub.f32 %v545, %v1133
        %v1135 = vand.u32 %v1134, 4294901760
        %1136 = vmatpush.msra.mxu0 %v1135
        %v1137 = vand.u32 %v543, 4294901760
        %v1138 = vsub.f32 %v543, %v1137
        %v1139 = vand.u32 %v1138, 4294901760
        %1140 = vmatpush.msra.mxu0 %v1139
        %v1141 = vand.u32 %v541, 4294901760
        %v1142 = vsub.f32 %v541, %v1141
        %v1143 = vand.u32 %v1142, 4294901760
        %1144 = vmatpush.msra.mxu0 %v1143
        %v1145 = vand.u32 %v539, 4294901760
        %v1146 = vsub.f32 %v539, %v1145
        %v1147 = vand.u32 %v1146, 4294901760
        %1148 = vmatpush.msra.mxu0 %v1147
        %v1149 = vand.u32 %v537, 4294901760
        %v1150 = vsub.f32 %v537, %v1149
        %v1151 = vand.u32 %v1150, 4294901760
        %1152 = vmatpush.msra.mxu0 %v1151
        %v1153 = vand.u32 %v535, 4294901760
        %v1154 = vsub.f32 %v535, %v1153
        %v1155 = vand.u32 %v1154, 4294901760
        %1156 = vmatpush.msra.mxu0 %v1155
        %v1157 = vand.u32 %v533, 4294901760
        %v1158 = vsub.f32 %v533, %v1157
        %v1159 = vand.u32 %v1158, 4294901760
        %1160 = vmatpush.msra.mxu0 %v1159
        %v1161 = vand.u32 %v531, 4294901760
        %v1162 = vsub.f32 %v531, %v1161
        %v1163 = vand.u32 %v1162, 4294901760
        %1164 = vmatpush.msra.mxu0 %v1163
        %v1165 = vand.u32 %v529, 4294901760
        %v1166 = vsub.f32 %v529, %v1165
        %v1167 = vand.u32 %v1166, 4294901760
        %1168 = vmatpush.msra.mxu0 %v1167
        %v1169 = vand.u32 %v527, 4294901760
        %v1170 = vsub.f32 %v527, %v1169
        %v1171 = vand.u32 %v1170, 4294901760
        %1172 = vmatpush.msra.mxu0 %v1171
        %v1173 = vand.u32 %v525, 4294901760
        %v1174 = vsub.f32 %v525, %v1173
        %v1175 = vand.u32 %v1174, 4294901760
        %1176 = vmatpush.msra.mxu0 %v1175
        %v1177 = vand.u32 %v523, 4294901760
        %v1178 = vsub.f32 %v523, %v1177
        %v1179 = vand.u32 %v1178, 4294901760
        %1180 = vmatpush.msra.mxu0 %v1179
        %v1181 = vand.u32 %v521, 4294901760
        %v1182 = vsub.f32 %v521, %v1181
        %v1183 = vand.u32 %v1182, 4294901760
        %1184 = vmatpush.msra.mxu0 %v1183
        %v1185 = vand.u32 %v519, 4294901760
        %v1186 = vsub.f32 %v519, %v1185
        %v1187 = vand.u32 %v1186, 4294901760
        %1188 = vmatpush.msra.mxu0 %v1187
        %v1189 = vand.u32 %v517, 4294901760
        %v1190 = vsub.f32 %v517, %v1189
        %v1191 = vand.u32 %v1190, 4294901760
        %1192 = vmatpush.msra.mxu0 %v1191
        %v1193 = vand.u32 %v415, 4294901760
        %1194 = vmatmul.f32.gmra.mxu0 %v1193
        %v1195 = vpop.f32.mrf.mxu0
        %v1196 = vadd.f32 %v1037, %v1195
        %v1197 = vand.u32 %v416, 4294901760
        %1198 = vmatmul.f32.gmra.mxu0 %v1197
        %v1199 = vpop.f32.mrf.mxu0
        %v1200 = vadd.f32 %v1043, %v1199
        %v1201 = vand.u32 %v417, 4294901760
        %1202 = vmatmul.f32.gmra.mxu0 %v1201
        %v1203 = vpop.f32.mrf.mxu0
        %v1204 = vadd.f32 %v1049, %v1203
        %v1205 = vand.u32 %v418, 4294901760
        %1206 = vmatmul.f32.gmra.mxu0 %v1205
        %v1207 = vpop.f32.mrf.mxu0
        %v1208 = vadd.f32 %v1055, %v1207
        %v1209 = vand.u32 %v419, 4294901760
        %1210 = vmatmul.f32.gmra.mxu0 %v1209
        %v1211 = vpop.f32.mrf.mxu0
        %v1212 = vadd.f32 %v1061, %v1211
        %v1213 = vand.u32 %v420, 4294901760
        %1214 = vmatmul.f32.gmra.mxu0 %v1213
        %v1215 = vpop.f32.mrf.mxu0
        %v1216 = vadd.f32 %v1067, %v1215
        %v1217 = vand.u32 %v421, 4294901760
        %1218 = vmatmul.f32.gmra.mxu0 %v1217
        %v1219 = vpop.f32.mrf.mxu0
        %v1220 = vadd.f32 %v1073, %v1219
        %v1221 = vand.u32 %v422, 4294901760
        %1222 = vmatmul.f32.gmra.mxu0 %v1221
        %v1223 = vpop.f32.mrf.mxu0
        %v1224 = vadd.f32 %v1079, %v1223
        %v1225 = vand.u32 %v423, 4294901760
        %1226 = vmatmul.f32.gmra.mxu0 %v1225
        %v1227 = vpop.f32.mrf.mxu0
        %v1228 = vadd.f32 %v1085, %v1227
        %v1229 = vand.u32 %v424, 4294901760
        %1230 = vmatmul.f32.gmra.mxu0 %v1229
        %v1231 = vpop.f32.mrf.mxu0
        %v1232 = vadd.f32 %v1091, %v1231
        %v1233 = vand.u32 %v425, 4294901760
        %1234 = vmatmul.f32.gmra.mxu0 %v1233
        %v1235 = vpop.f32.mrf.mxu0
        %v1236 = vadd.f32 %v1097, %v1235
        %v1237 = vand.u32 %v426, 4294901760
        %1238 = vmatmul.f32.gmra.mxu0 %v1237
        %v1239 = vpop.f32.mrf.mxu0
        %v1240 = vadd.f32 %v1103, %v1239
        %v1241 = vand.u32 %v427, 4294901760
        %1242 = vmatmul.f32.gmra.mxu0 %v1241
        %v1243 = vpop.f32.mrf.mxu0
        %v1244 = vadd.f32 %v1109, %v1243
        %v1245 = vand.u32 %v428, 4294901760
        %1246 = vmatmul.f32.gmra.mxu0 %v1245
        %v1247 = vpop.f32.mrf.mxu0
        %v1248 = vadd.f32 %v1115, %v1247
        %v1249 = vand.u32 %v429, 4294901760
        %1250 = vmatmul.f32.gmra.mxu0 %v1249
        %v1251 = vpop.f32.mrf.mxu0
        %v1252 = vadd.f32 %v1121, %v1251
        %v1253 = vand.u32 %v430, 4294901760
        %1254 = vmatmul.f32.gmra.mxu0 %v1253
        %v1255 = vpop.f32.mrf.mxu0
        %v1256 = vadd.f32 %v1127, %v1255
        %1257 = vdwg.mxu0
        %v1258 = vand.u32 %v547, 4294901760
        %1259 = vmatpush.msra.mxu0 %v1258
        %v1260 = vand.u32 %v545, 4294901760
        %1261 = vmatpush.msra.mxu0 %v1260
        %v1262 = vand.u32 %v543, 4294901760
        %1263 = vmatpush.msra.mxu0 %v1262
        %v1264 = vand.u32 %v541, 4294901760
        %1265 = vmatpush.msra.mxu0 %v1264
        %v1266 = vand.u32 %v539, 4294901760
        %1267 = vmatpush.msra.mxu0 %v1266
        %v1268 = vand.u32 %v537, 4294901760
        %1269 = vmatpush.msra.mxu0 %v1268
        %v1270 = vand.u32 %v535, 4294901760
        %1271 = vmatpush.msra.mxu0 %v1270
        %v1272 = vand.u32 %v533, 4294901760
        %1273 = vmatpush.msra.mxu0 %v1272
        %v1274 = vand.u32 %v531, 4294901760
        %1275 = vmatpush.msra.mxu0 %v1274
        %v1276 = vand.u32 %v529, 4294901760
        %1277 = vmatpush.msra.mxu0 %v1276
        %v1278 = vand.u32 %v527, 4294901760
        %1279 = vmatpush.msra.mxu0 %v1278
        %v1280 = vand.u32 %v525, 4294901760
        %1281 = vmatpush.msra.mxu0 %v1280
        %v1282 = vand.u32 %v523, 4294901760
        %1283 = vmatpush.msra.mxu0 %v1282
        %v1284 = vand.u32 %v521, 4294901760
        %1285 = vmatpush.msra.mxu0 %v1284
        %v1286 = vand.u32 %v519, 4294901760
        %1287 = vmatpush.msra.mxu0 %v1286
        %v1288 = vand.u32 %v517, 4294901760
        %1289 = vmatpush.msra.mxu0 %v1288
        %v1290 = vand.u32 %v415, 4294901760
        %1291 = vmatmul.f32.gmra.mxu0 %v1290
        %v1292 = vpop.f32.mrf.mxu0
        %v1293 = vadd.f32 %v1196, %v1292
        %v1294 = vand.u32 %v416, 4294901760
        %1295 = vmatmul.f32.gmra.mxu0 %v1294
        %v1296 = vpop.f32.mrf.mxu0
        %v1297 = vadd.f32 %v1200, %v1296
        %v1298 = vand.u32 %v417, 4294901760
        %1299 = vmatmul.f32.gmra.mxu0 %v1298
        %v1300 = vpop.f32.mrf.mxu0
        %v1301 = vadd.f32 %v1204, %v1300
        %v1302 = vand.u32 %v418, 4294901760
        %1303 = vmatmul.f32.gmra.mxu0 %v1302
        %v1304 = vpop.f32.mrf.mxu0
        %v1305 = vadd.f32 %v1208, %v1304
        %v1306 = vand.u32 %v419, 4294901760
        %1307 = vmatmul.f32.gmra.mxu0 %v1306
        %v1308 = vpop.f32.mrf.mxu0
        %v1309 = vadd.f32 %v1212, %v1308
        %v1310 = vand.u32 %v420, 4294901760
        %1311 = vmatmul.f32.gmra.mxu0 %v1310
        %v1312 = vpop.f32.mrf.mxu0
        %v1313 = vadd.f32 %v1216, %v1312
        %v1314 = vand.u32 %v421, 4294901760
        %1315 = vmatmul.f32.gmra.mxu0 %v1314
        %v1316 = vpop.f32.mrf.mxu0
        %v1317 = vadd.f32 %v1220, %v1316
        %v1318 = vand.u32 %v422, 4294901760
        %1319 = vmatmul.f32.gmra.mxu0 %v1318
        %v1320 = vpop.f32.mrf.mxu0
        %v1321 = vadd.f32 %v1224, %v1320
        %v1322 = vand.u32 %v423, 4294901760
        %1323 = vmatmul.f32.gmra.mxu0 %v1322
        %v1324 = vpop.f32.mrf.mxu0
        %v1325 = vadd.f32 %v1228, %v1324
        %v1326 = vand.u32 %v424, 4294901760
        %1327 = vmatmul.f32.gmra.mxu0 %v1326
        %v1328 = vpop.f32.mrf.mxu0
        %v1329 = vadd.f32 %v1232, %v1328
        %v1330 = vand.u32 %v425, 4294901760
        %1331 = vmatmul.f32.gmra.mxu0 %v1330
        %v1332 = vpop.f32.mrf.mxu0
        %v1333 = vadd.f32 %v1236, %v1332
        %v1334 = vand.u32 %v426, 4294901760
        %1335 = vmatmul.f32.gmra.mxu0 %v1334
        %v1336 = vpop.f32.mrf.mxu0
        %v1337 = vadd.f32 %v1240, %v1336
        %v1338 = vand.u32 %v427, 4294901760
        %1339 = vmatmul.f32.gmra.mxu0 %v1338
        %v1340 = vpop.f32.mrf.mxu0
        %v1341 = vadd.f32 %v1244, %v1340
        %v1342 = vand.u32 %v428, 4294901760
        %1343 = vmatmul.f32.gmra.mxu0 %v1342
        %v1344 = vpop.f32.mrf.mxu0
        %v1345 = vadd.f32 %v1248, %v1344
        %v1346 = vand.u32 %v429, 4294901760
        %1347 = vmatmul.f32.gmra.mxu0 %v1346
        %v1348 = vpop.f32.mrf.mxu0
        %v1349 = vadd.f32 %v1252, %v1348
        %v1350 = vand.u32 %v430, 4294901760
        %1351 = vmatmul.f32.gmra.mxu0 %v1350
        %v1352 = vpop.f32.mrf.mxu0
        %v1353 = vadd.f32 %v1256, %v1352
        %1354 = vdwg.mxu0
        %v1355 = vand.u32 %v548, 4294901760
        %1356 = vmatpush.msra.mxu0 %v1355
        %v1357 = vand.u32 %v546, 4294901760
        %1358 = vmatpush.msra.mxu0 %v1357
        %v1359 = vand.u32 %v544, 4294901760
        %1360 = vmatpush.msra.mxu0 %v1359
        %v1361 = vand.u32 %v542, 4294901760
        %1362 = vmatpush.msra.mxu0 %v1361
        %v1363 = vand.u32 %v540, 4294901760
        %1364 = vmatpush.msra.mxu0 %v1363
        %v1365 = vand.u32 %v538, 4294901760
        %1366 = vmatpush.msra.mxu0 %v1365
        %v1367 = vand.u32 %v536, 4294901760
        %1368 = vmatpush.msra.mxu0 %v1367
        %v1369 = vand.u32 %v534, 4294901760
        %1370 = vmatpush.msra.mxu0 %v1369
        %v1371 = vand.u32 %v532, 4294901760
        %1372 = vmatpush.msra.mxu0 %v1371
        %v1373 = vand.u32 %v530, 4294901760
        %1374 = vmatpush.msra.mxu0 %v1373
        %v1375 = vand.u32 %v528, 4294901760
        %1376 = vmatpush.msra.mxu0 %v1375
        %v1377 = vand.u32 %v526, 4294901760
        %1378 = vmatpush.msra.mxu0 %v1377
        %v1379 = vand.u32 %v524, 4294901760
        %1380 = vmatpush.msra.mxu0 %v1379
        %v1381 = vand.u32 %v522, 4294901760
        %1382 = vmatpush.msra.mxu0 %v1381
        %v1383 = vand.u32 %v520, 4294901760
        %1384 = vmatpush.msra.mxu0 %v1383
        %v1385 = vand.u32 %v518, 4294901760
        %1386 = vmatpush.msra.mxu0 %v1385
        %v1387 = vand.u32 %v415, 4294901760
        %v1388 = vsub.f32 %v415, %v1387
        %v1389 = vand.u32 %v1388, 4294901760
        %v1390 = vsub.f32 %v1388, %v1389
        %v1391 = vand.u32 %v1390, 4294901760
        %1392 = vmatmul.f32.gmra.mxu0 %v1391
        %v1393 = vpop.f32.mrf.mxu0
        %v1394 = vadd.f32 0.0, %v1393
        %v1395 = vand.u32 %v416, 4294901760
        %v1396 = vsub.f32 %v416, %v1395
        %v1397 = vand.u32 %v1396, 4294901760
        %v1398 = vsub.f32 %v1396, %v1397
        %v1399 = vand.u32 %v1398, 4294901760
        %1400 = vmatmul.f32.gmra.mxu0 %v1399
        %v1401 = vpop.f32.mrf.mxu0
        %v1402 = vadd.f32 0.0, %v1401
        %v1403 = vand.u32 %v417, 4294901760
        %v1404 = vsub.f32 %v417, %v1403
        %v1405 = vand.u32 %v1404, 4294901760
        %v1406 = vsub.f32 %v1404, %v1405
        %v1407 = vand.u32 %v1406, 4294901760
        %1408 = vmatmul.f32.gmra.mxu0 %v1407
        %v1409 = vpop.f32.mrf.mxu0
        %v1410 = vadd.f32 0.0, %v1409
        %v1411 = vand.u32 %v418, 4294901760
        %v1412 = vsub.f32 %v418, %v1411
        %v1413 = vand.u32 %v1412, 4294901760
        %v1414 = vsub.f32 %v1412, %v1413
        %v1415 = vand.u32 %v1414, 4294901760
        %1416 = vmatmul.f32.gmra.mxu0 %v1415
        %v1417 = vpop.f32.mrf.mxu0
        %v1418 = vadd.f32 0.0, %v1417
        %v1419 = vand.u32 %v419, 4294901760
        %v1420 = vsub.f32 %v419, %v1419
        %v1421 = vand.u32 %v1420, 4294901760
        %v1422 = vsub.f32 %v1420, %v1421
        %v1423 = vand.u32 %v1422, 4294901760
        %1424 = vmatmul.f32.gmra.mxu0 %v1423
        %v1425 = vpop.f32.mrf.mxu0
        %v1426 = vadd.f32 0.0, %v1425
        %v1427 = vand.u32 %v420, 4294901760
        %v1428 = vsub.f32 %v420, %v1427
        %v1429 = vand.u32 %v1428, 4294901760
        %v1430 = vsub.f32 %v1428, %v1429
        %v1431 = vand.u32 %v1430, 4294901760
        %1432 = vmatmul.f32.gmra.mxu0 %v1431
        %v1433 = vpop.f32.mrf.mxu0
        %v1434 = vadd.f32 0.0, %v1433
        %v1435 = vand.u32 %v421, 4294901760
        %v1436 = vsub.f32 %v421, %v1435
        %v1437 = vand.u32 %v1436, 4294901760
        %v1438 = vsub.f32 %v1436, %v1437
        %v1439 = vand.u32 %v1438, 4294901760
        %1440 = vmatmul.f32.gmra.mxu0 %v1439
        %v1441 = vpop.f32.mrf.mxu0
        %v1442 = vadd.f32 0.0, %v1441
        %v1443 = vand.u32 %v422, 4294901760
        %v1444 = vsub.f32 %v422, %v1443
        %v1445 = vand.u32 %v1444, 4294901760
        %v1446 = vsub.f32 %v1444, %v1445
        %v1447 = vand.u32 %v1446, 4294901760
        %1448 = vmatmul.f32.gmra.mxu0 %v1447
        %v1449 = vpop.f32.mrf.mxu0
        %v1450 = vadd.f32 0.0, %v1449
        %v1451 = vand.u32 %v423, 4294901760
        %v1452 = vsub.f32 %v423, %v1451
        %v1453 = vand.u32 %v1452, 4294901760
        %v1454 = vsub.f32 %v1452, %v1453
        %v1455 = vand.u32 %v1454, 4294901760
        %1456 = vmatmul.f32.gmra.mxu0 %v1455
        %v1457 = vpop.f32.mrf.mxu0
        %v1458 = vadd.f32 0.0, %v1457
        %v1459 = vand.u32 %v424, 4294901760
        %v1460 = vsub.f32 %v424, %v1459
        %v1461 = vand.u32 %v1460, 4294901760
        %v1462 = vsub.f32 %v1460, %v1461
        %v1463 = vand.u32 %v1462, 4294901760
        %1464 = vmatmul.f32.gmra.mxu0 %v1463
        %v1465 = vpop.f32.mrf.mxu0
        %v1466 = vadd.f32 0.0, %v1465
        %v1467 = vand.u32 %v425, 4294901760
        %v1468 = vsub.f32 %v425, %v1467
        %v1469 = vand.u32 %v1468, 4294901760
        %v1470 = vsub.f32 %v1468, %v1469
        %v1471 = vand.u32 %v1470, 4294901760
        %1472 = vmatmul.f32.gmra.mxu0 %v1471
        %v1473 = vpop.f32.mrf.mxu0
        %v1474 = vadd.f32 0.0, %v1473
        %v1475 = vand.u32 %v426, 4294901760
        %v1476 = vsub.f32 %v426, %v1475
        %v1477 = vand.u32 %v1476, 4294901760
        %v1478 = vsub.f32 %v1476, %v1477
        %v1479 = vand.u32 %v1478, 4294901760
        %1480 = vmatmul.f32.gmra.mxu0 %v1479
        %v1481 = vpop.f32.mrf.mxu0
        %v1482 = vadd.f32 0.0, %v1481
        %v1483 = vand.u32 %v427, 4294901760
        %v1484 = vsub.f32 %v427, %v1483
        %v1485 = vand.u32 %v1484, 4294901760
        %v1486 = vsub.f32 %v1484, %v1485
        %v1487 = vand.u32 %v1486, 4294901760
        %1488 = vmatmul.f32.gmra.mxu0 %v1487
        %v1489 = vpop.f32.mrf.mxu0
        %v1490 = vadd.f32 0.0, %v1489
        %v1491 = vand.u32 %v428, 4294901760
        %v1492 = vsub.f32 %v428, %v1491
        %v1493 = vand.u32 %v1492, 4294901760
        %v1494 = vsub.f32 %v1492, %v1493
        %v1495 = vand.u32 %v1494, 4294901760
        %1496 = vmatmul.f32.gmra.mxu0 %v1495
        %v1497 = vpop.f32.mrf.mxu0
        %v1498 = vadd.f32 0.0, %v1497
        %v1499 = vand.u32 %v429, 4294901760
        %v1500 = vsub.f32 %v429, %v1499
        %v1501 = vand.u32 %v1500, 4294901760
        %v1502 = vsub.f32 %v1500, %v1501
        %v1503 = vand.u32 %v1502, 4294901760
        %1504 = vmatmul.f32.gmra.mxu0 %v1503
        %v1505 = vpop.f32.mrf.mxu0
        %v1506 = vadd.f32 0.0, %v1505
        %v1507 = vand.u32 %v430, 4294901760
        %v1508 = vsub.f32 %v430, %v1507
        %v1509 = vand.u32 %v1508, 4294901760
        %v1510 = vsub.f32 %v1508, %v1509
        %v1511 = vand.u32 %v1510, 4294901760
        %1512 = vmatmul.f32.gmra.mxu0 %v1511
        %v1513 = vpop.f32.mrf.mxu0
        %v1514 = vadd.f32 0.0, %v1513
        %1515 = vdwg.mxu0
        %v1516 = vand.u32 %v548, 4294901760
        %v1517 = vsub.f32 %v548, %v1516
        %v1518 = vand.u32 %v1517, 4294901760
        %v1519 = vsub.f32 %v1517, %v1518
        %v1520 = vand.u32 %v1519, 4294901760
        %1521 = vmatpush.msra.mxu0 %v1520
        %v1522 = vand.u32 %v546, 4294901760
        %v1523 = vsub.f32 %v546, %v1522
        %v1524 = vand.u32 %v1523, 4294901760
        %v1525 = vsub.f32 %v1523, %v1524
        %v1526 = vand.u32 %v1525, 4294901760
        %1527 = vmatpush.msra.mxu0 %v1526
        %v1528 = vand.u32 %v544, 4294901760
        %v1529 = vsub.f32 %v544, %v1528
        %v1530 = vand.u32 %v1529, 4294901760
        %v1531 = vsub.f32 %v1529, %v1530
        %v1532 = vand.u32 %v1531, 4294901760
        %1533 = vmatpush.msra.mxu0 %v1532
        %v1534 = vand.u32 %v542, 4294901760
        %v1535 = vsub.f32 %v542, %v1534
        %v1536 = vand.u32 %v1535, 4294901760
        %v1537 = vsub.f32 %v1535, %v1536
        %v1538 = vand.u32 %v1537, 4294901760
        %1539 = vmatpush.msra.mxu0 %v1538
        %v1540 = vand.u32 %v540, 4294901760
        %v1541 = vsub.f32 %v540, %v1540
        %v1542 = vand.u32 %v1541, 4294901760
        %v1543 = vsub.f32 %v1541, %v1542
        %v1544 = vand.u32 %v1543, 4294901760
        %1545 = vmatpush.msra.mxu0 %v1544
        %v1546 = vand.u32 %v538, 4294901760
        %v1547 = vsub.f32 %v538, %v1546
        %v1548 = vand.u32 %v1547, 4294901760
        %v1549 = vsub.f32 %v1547, %v1548
        %v1550 = vand.u32 %v1549, 4294901760
        %1551 = vmatpush.msra.mxu0 %v1550
        %v1552 = vand.u32 %v536, 4294901760
        %v1553 = vsub.f32 %v536, %v1552
        %v1554 = vand.u32 %v1553, 4294901760
        %v1555 = vsub.f32 %v1553, %v1554
        %v1556 = vand.u32 %v1555, 4294901760
        %1557 = vmatpush.msra.mxu0 %v1556
        %v1558 = vand.u32 %v534, 4294901760
        %v1559 = vsub.f32 %v534, %v1558
        %v1560 = vand.u32 %v1559, 4294901760
        %v1561 = vsub.f32 %v1559, %v1560
        %v1562 = vand.u32 %v1561, 4294901760
        %1563 = vmatpush.msra.mxu0 %v1562
        %v1564 = vand.u32 %v532, 4294901760
        %v1565 = vsub.f32 %v532, %v1564
        %v1566 = vand.u32 %v1565, 4294901760
        %v1567 = vsub.f32 %v1565, %v1566
        %v1568 = vand.u32 %v1567, 4294901760
        %1569 = vmatpush.msra.mxu0 %v1568
        %v1570 = vand.u32 %v530, 4294901760
        %v1571 = vsub.f32 %v530, %v1570
        %v1572 = vand.u32 %v1571, 4294901760
        %v1573 = vsub.f32 %v1571, %v1572
        %v1574 = vand.u32 %v1573, 4294901760
        %1575 = vmatpush.msra.mxu0 %v1574
        %v1576 = vand.u32 %v528, 4294901760
        %v1577 = vsub.f32 %v528, %v1576
        %v1578 = vand.u32 %v1577, 4294901760
        %v1579 = vsub.f32 %v1577, %v1578
        %v1580 = vand.u32 %v1579, 4294901760
        %1581 = vmatpush.msra.mxu0 %v1580
        %v1582 = vand.u32 %v526, 4294901760
        %v1583 = vsub.f32 %v526, %v1582
        %v1584 = vand.u32 %v1583, 4294901760
        %v1585 = vsub.f32 %v1583, %v1584
        %v1586 = vand.u32 %v1585, 4294901760
        %1587 = vmatpush.msra.mxu0 %v1586
        %v1588 = vand.u32 %v524, 4294901760
        %v1589 = vsub.f32 %v524, %v1588
        %v1590 = vand.u32 %v1589, 4294901760
        %v1591 = vsub.f32 %v1589, %v1590
        %v1592 = vand.u32 %v1591, 4294901760
        %1593 = vmatpush.msra.mxu0 %v1592
        %v1594 = vand.u32 %v522, 4294901760
        %v1595 = vsub.f32 %v522, %v1594
        %v1596 = vand.u32 %v1595, 4294901760
        %v1597 = vsub.f32 %v1595, %v1596
        %v1598 = vand.u32 %v1597, 4294901760
        %1599 = vmatpush.msra.mxu0 %v1598
        %v1600 = vand.u32 %v520, 4294901760
        %v1601 = vsub.f32 %v520, %v1600
        %v1602 = vand.u32 %v1601, 4294901760
        %v1603 = vsub.f32 %v1601, %v1602
        %v1604 = vand.u32 %v1603, 4294901760
        %1605 = vmatpush.msra.mxu0 %v1604
        %v1606 = vand.u32 %v518, 4294901760
        %v1607 = vsub.f32 %v518, %v1606
        %v1608 = vand.u32 %v1607, 4294901760
        %v1609 = vsub.f32 %v1607, %v1608
        %v1610 = vand.u32 %v1609, 4294901760
        %1611 = vmatpush.msra.mxu0 %v1610
        %v1612 = vand.u32 %v415, 4294901760
        %1613 = vmatmul.f32.gmra.mxu0 %v1612
        %v1614 = vpop.f32.mrf.mxu0
        %v1615 = vadd.f32 %v1394, %v1614
        %v1616 = vand.u32 %v416, 4294901760
        %1617 = vmatmul.f32.gmra.mxu0 %v1616
        %v1618 = vpop.f32.mrf.mxu0
        %v1619 = vadd.f32 %v1402, %v1618
        %v1620 = vand.u32 %v417, 4294901760
        %1621 = vmatmul.f32.gmra.mxu0 %v1620
        %v1622 = vpop.f32.mrf.mxu0
        %v1623 = vadd.f32 %v1410, %v1622
        %v1624 = vand.u32 %v418, 4294901760
        %1625 = vmatmul.f32.gmra.mxu0 %v1624
        %v1626 = vpop.f32.mrf.mxu0
        %v1627 = vadd.f32 %v1418, %v1626
        %v1628 = vand.u32 %v419, 4294901760
        %1629 = vmatmul.f32.gmra.mxu0 %v1628
        %v1630 = vpop.f32.mrf.mxu0
        %v1631 = vadd.f32 %v1426, %v1630
        %v1632 = vand.u32 %v420, 4294901760
        %1633 = vmatmul.f32.gmra.mxu0 %v1632
        %v1634 = vpop.f32.mrf.mxu0
        %v1635 = vadd.f32 %v1434, %v1634
        %v1636 = vand.u32 %v421, 4294901760
        %1637 = vmatmul.f32.gmra.mxu0 %v1636
        %v1638 = vpop.f32.mrf.mxu0
        %v1639 = vadd.f32 %v1442, %v1638
        %v1640 = vand.u32 %v422, 4294901760
        %1641 = vmatmul.f32.gmra.mxu0 %v1640
        %v1642 = vpop.f32.mrf.mxu0
        %v1643 = vadd.f32 %v1450, %v1642
        %v1644 = vand.u32 %v423, 4294901760
        %1645 = vmatmul.f32.gmra.mxu0 %v1644
        %v1646 = vpop.f32.mrf.mxu0
        %v1647 = vadd.f32 %v1458, %v1646
        %v1648 = vand.u32 %v424, 4294901760
        %1649 = vmatmul.f32.gmra.mxu0 %v1648
        %v1650 = vpop.f32.mrf.mxu0
        %v1651 = vadd.f32 %v1466, %v1650
        %v1652 = vand.u32 %v425, 4294901760
        %1653 = vmatmul.f32.gmra.mxu0 %v1652
        %v1654 = vpop.f32.mrf.mxu0
        %v1655 = vadd.f32 %v1474, %v1654
        %v1656 = vand.u32 %v426, 4294901760
        %1657 = vmatmul.f32.gmra.mxu0 %v1656
        %v1658 = vpop.f32.mrf.mxu0
        %v1659 = vadd.f32 %v1482, %v1658
        %v1660 = vand.u32 %v427, 4294901760
        %1661 = vmatmul.f32.gmra.mxu0 %v1660
        %v1662 = vpop.f32.mrf.mxu0
        %v1663 = vadd.f32 %v1490, %v1662
        %v1664 = vand.u32 %v428, 4294901760
        %1665 = vmatmul.f32.gmra.mxu0 %v1664
        %v1666 = vpop.f32.mrf.mxu0
        %v1667 = vadd.f32 %v1498, %v1666
        %v1668 = vand.u32 %v429, 4294901760
        %1669 = vmatmul.f32.gmra.mxu0 %v1668
        %v1670 = vpop.f32.mrf.mxu0
        %v1671 = vadd.f32 %v1506, %v1670
        %v1672 = vand.u32 %v430, 4294901760
        %1673 = vmatmul.f32.gmra.mxu0 %v1672
        %v1674 = vpop.f32.mrf.mxu0
        %v1675 = vadd.f32 %v1514, %v1674
        %1676 = vdwg.mxu0
        %v1677 = vand.u32 %v548, 4294901760
        %v1678 = vsub.f32 %v548, %v1677
        %1679 = vmatpush.msra.mxu0 %v1678
        %v1680 = vand.u32 %v546, 4294901760
        %v1681 = vsub.f32 %v546, %v1680
        %1682 = vmatpush.msra.mxu0 %v1681
        %v1683 = vand.u32 %v544, 4294901760
        %v1684 = vsub.f32 %v544, %v1683
        %1685 = vmatpush.msra.mxu0 %v1684
        %v1686 = vand.u32 %v542, 4294901760
        %v1687 = vsub.f32 %v542, %v1686
        %1688 = vmatpush.msra.mxu0 %v1687
        %v1689 = vand.u32 %v540, 4294901760
        %v1690 = vsub.f32 %v540, %v1689
        %1691 = vmatpush.msra.mxu0 %v1690
        %v1692 = vand.u32 %v538, 4294901760
        %v1693 = vsub.f32 %v538, %v1692
        %1694 = vmatpush.msra.mxu0 %v1693
        %v1695 = vand.u32 %v536, 4294901760
        %v1696 = vsub.f32 %v536, %v1695
        %1697 = vmatpush.msra.mxu0 %v1696
        %v1698 = vand.u32 %v534, 4294901760
        %v1699 = vsub.f32 %v534, %v1698
        %1700 = vmatpush.msra.mxu0 %v1699
        %v1701 = vand.u32 %v532, 4294901760
        %v1702 = vsub.f32 %v532, %v1701
        %1703 = vmatpush.msra.mxu0 %v1702
        %v1704 = vand.u32 %v530, 4294901760
        %v1705 = vsub.f32 %v530, %v1704
        %1706 = vmatpush.msra.mxu0 %v1705
        %v1707 = vand.u32 %v528, 4294901760
        %v1708 = vsub.f32 %v528, %v1707
        %1709 = vmatpush.msra.mxu0 %v1708
        %v1710 = vand.u32 %v526, 4294901760
        %v1711 = vsub.f32 %v526, %v1710
        %1712 = vmatpush.msra.mxu0 %v1711
        %v1713 = vand.u32 %v524, 4294901760
        %v1714 = vsub.f32 %v524, %v1713
        %1715 = vmatpush.msra.mxu0 %v1714
        %v1716 = vand.u32 %v522, 4294901760
        %v1717 = vsub.f32 %v522, %v1716
        %1718 = vmatpush.msra.mxu0 %v1717
        %v1719 = vand.u32 %v520, 4294901760
        %v1720 = vsub.f32 %v520, %v1719
        %1721 = vmatpush.msra.mxu0 %v1720
        %v1722 = vand.u32 %v518, 4294901760
        %v1723 = vsub.f32 %v518, %v1722
        %1724 = vmatpush.msra.mxu0 %v1723
        %v1725 = vand.u32 %v415, 4294901760
        %v1726 = vsub.f32 %v415, %v1725
        %1727 = vmatmul.f32.gmra.mxu0 %v1726
        %v1728 = vpop.f32.mrf.mxu0
        %v1729 = vadd.f32 %v1615, %v1728
        %v1730 = vand.u32 %v416, 4294901760
        %v1731 = vsub.f32 %v416, %v1730
        %1732 = vmatmul.f32.gmra.mxu0 %v1731
        %v1733 = vpop.f32.mrf.mxu0
        %v1734 = vadd.f32 %v1619, %v1733
        %v1735 = vand.u32 %v417, 4294901760
        %v1736 = vsub.f32 %v417, %v1735
        %1737 = vmatmul.f32.gmra.mxu0 %v1736
        %v1738 = vpop.f32.mrf.mxu0
        %v1739 = vadd.f32 %v1623, %v1738
        %v1740 = vand.u32 %v418, 4294901760
        %v1741 = vsub.f32 %v418, %v1740
        %1742 = vmatmul.f32.gmra.mxu0 %v1741
        %v1743 = vpop.f32.mrf.mxu0
        %v1744 = vadd.f32 %v1627, %v1743
        %v1745 = vand.u32 %v419, 4294901760
        %v1746 = vsub.f32 %v419, %v1745
        %1747 = vmatmul.f32.gmra.mxu0 %v1746
        %v1748 = vpop.f32.mrf.mxu0
        %v1749 = vadd.f32 %v1631, %v1748
        %v1750 = vand.u32 %v420, 4294901760
        %v1751 = vsub.f32 %v420, %v1750
        %1752 = vmatmul.f32.gmra.mxu0 %v1751
        %v1753 = vpop.f32.mrf.mxu0
        %v1754 = vadd.f32 %v1635, %v1753
        %v1755 = vand.u32 %v421, 4294901760
        %v1756 = vsub.f32 %v421, %v1755
        %1757 = vmatmul.f32.gmra.mxu0 %v1756
        %v1758 = vpop.f32.mrf.mxu0
        %v1759 = vadd.f32 %v1639, %v1758
        %v1760 = vand.u32 %v422, 4294901760
        %v1761 = vsub.f32 %v422, %v1760
        %1762 = vmatmul.f32.gmra.mxu0 %v1761
        %v1763 = vpop.f32.mrf.mxu0
        %v1764 = vadd.f32 %v1643, %v1763
        %v1765 = vand.u32 %v423, 4294901760
        %v1766 = vsub.f32 %v423, %v1765
        %1767 = vmatmul.f32.gmra.mxu0 %v1766
        %v1768 = vpop.f32.mrf.mxu0
        %v1769 = vadd.f32 %v1647, %v1768
        %v1770 = vand.u32 %v424, 4294901760
        %v1771 = vsub.f32 %v424, %v1770
        %1772 = vmatmul.f32.gmra.mxu0 %v1771
        %v1773 = vpop.f32.mrf.mxu0
        %v1774 = vadd.f32 %v1651, %v1773
        %v1775 = vand.u32 %v425, 4294901760
        %v1776 = vsub.f32 %v425, %v1775
        %1777 = vmatmul.f32.gmra.mxu0 %v1776
        %v1778 = vpop.f32.mrf.mxu0
        %v1779 = vadd.f32 %v1655, %v1778
        %v1780 = vand.u32 %v426, 4294901760
        %v1781 = vsub.f32 %v426, %v1780
        %1782 = vmatmul.f32.gmra.mxu0 %v1781
        %v1783 = vpop.f32.mrf.mxu0
        %v1784 = vadd.f32 %v1659, %v1783
        %v1785 = vand.u32 %v427, 4294901760
        %v1786 = vsub.f32 %v427, %v1785
        %1787 = vmatmul.f32.gmra.mxu0 %v1786
        %v1788 = vpop.f32.mrf.mxu0
        %v1789 = vadd.f32 %v1663, %v1788
        %v1790 = vand.u32 %v428, 4294901760
        %v1791 = vsub.f32 %v428, %v1790
        %1792 = vmatmul.f32.gmra.mxu0 %v1791
        %v1793 = vpop.f32.mrf.mxu0
        %v1794 = vadd.f32 %v1667, %v1793
        %v1795 = vand.u32 %v429, 4294901760
        %v1796 = vsub.f32 %v429, %v1795
        %1797 = vmatmul.f32.gmra.mxu0 %v1796
        %v1798 = vpop.f32.mrf.mxu0
        %v1799 = vadd.f32 %v1671, %v1798
        %v1800 = vand.u32 %v430, 4294901760
        %v1801 = vsub.f32 %v430, %v1800
        %1802 = vmatmul.f32.gmra.mxu0 %v1801
        %v1803 = vpop.f32.mrf.mxu0
        %v1804 = vadd.f32 %v1675, %v1803
        %1805 = vdwg.mxu0
        %v1806 = vand.u32 %v548, 4294901760
        %1807 = vmatpush.msra.mxu0 %v1806
        %v1808 = vand.u32 %v546, 4294901760
        %1809 = vmatpush.msra.mxu0 %v1808
        %v1810 = vand.u32 %v544, 4294901760
        %1811 = vmatpush.msra.mxu0 %v1810
        %v1812 = vand.u32 %v542, 4294901760
        %1813 = vmatpush.msra.mxu0 %v1812
        %v1814 = vand.u32 %v540, 4294901760
        %1815 = vmatpush.msra.mxu0 %v1814
        %v1816 = vand.u32 %v538, 4294901760
        %1817 = vmatpush.msra.mxu0 %v1816
        %v1818 = vand.u32 %v536, 4294901760
        %1819 = vmatpush.msra.mxu0 %v1818
        %v1820 = vand.u32 %v534, 4294901760
        %1821 = vmatpush.msra.mxu0 %v1820
        %v1822 = vand.u32 %v532, 4294901760
        %1823 = vmatpush.msra.mxu0 %v1822
        %v1824 = vand.u32 %v530, 4294901760
        %1825 = vmatpush.msra.mxu0 %v1824
        %v1826 = vand.u32 %v528, 4294901760
        %1827 = vmatpush.msra.mxu0 %v1826
        %v1828 = vand.u32 %v526, 4294901760
        %1829 = vmatpush.msra.mxu0 %v1828
        %v1830 = vand.u32 %v524, 4294901760
        %1831 = vmatpush.msra.mxu0 %v1830
        %v1832 = vand.u32 %v522, 4294901760
        %1833 = vmatpush.msra.mxu0 %v1832
        %v1834 = vand.u32 %v520, 4294901760
        %1835 = vmatpush.msra.mxu0 %v1834
        %v1836 = vand.u32 %v518, 4294901760
        %1837 = vmatpush.msra.mxu0 %v1836
        %v1838 = vand.u32 %v415, 4294901760
        %v1839 = vsub.f32 %v415, %v1838
        %v1840 = vand.u32 %v1839, 4294901760
        %1841 = vmatmul.f32.gmra.mxu0 %v1840
        %v1842 = vpop.f32.mrf.mxu0
        %v1843 = vadd.f32 %v1729, %v1842
        %v1844 = vand.u32 %v416, 4294901760
        %v1845 = vsub.f32 %v416, %v1844
        %v1846 = vand.u32 %v1845, 4294901760
        %1847 = vmatmul.f32.gmra.mxu0 %v1846
        %v1848 = vpop.f32.mrf.mxu0
        %v1849 = vadd.f32 %v1734, %v1848
        %v1850 = vand.u32 %v417, 4294901760
        %v1851 = vsub.f32 %v417, %v1850
        %v1852 = vand.u32 %v1851, 4294901760
        %1853 = vmatmul.f32.gmra.mxu0 %v1852
        %v1854 = vpop.f32.mrf.mxu0
        %v1855 = vadd.f32 %v1739, %v1854
        %v1856 = vand.u32 %v418, 4294901760
        %v1857 = vsub.f32 %v418, %v1856
        %v1858 = vand.u32 %v1857, 4294901760
        %1859 = vmatmul.f32.gmra.mxu0 %v1858
        %v1860 = vpop.f32.mrf.mxu0
        %v1861 = vadd.f32 %v1744, %v1860
        %v1862 = vand.u32 %v419, 4294901760
        %v1863 = vsub.f32 %v419, %v1862
        %v1864 = vand.u32 %v1863, 4294901760
        %1865 = vmatmul.f32.gmra.mxu0 %v1864
        %v1866 = vpop.f32.mrf.mxu0
        %v1867 = vadd.f32 %v1749, %v1866
        %v1868 = vand.u32 %v420, 4294901760
        %v1869 = vsub.f32 %v420, %v1868
        %v1870 = vand.u32 %v1869, 4294901760
        %1871 = vmatmul.f32.gmra.mxu0 %v1870
        %v1872 = vpop.f32.mrf.mxu0
        %v1873 = vadd.f32 %v1754, %v1872
        %v1874 = vand.u32 %v421, 4294901760
        %v1875 = vsub.f32 %v421, %v1874
        %v1876 = vand.u32 %v1875, 4294901760
        %1877 = vmatmul.f32.gmra.mxu0 %v1876
        %v1878 = vpop.f32.mrf.mxu0
        %v1879 = vadd.f32 %v1759, %v1878
        %v1880 = vand.u32 %v422, 4294901760
        %v1881 = vsub.f32 %v422, %v1880
        %v1882 = vand.u32 %v1881, 4294901760
        %1883 = vmatmul.f32.gmra.mxu0 %v1882
        %v1884 = vpop.f32.mrf.mxu0
        %v1885 = vadd.f32 %v1764, %v1884
        %v1886 = vand.u32 %v423, 4294901760
        %v1887 = vsub.f32 %v423, %v1886
        %v1888 = vand.u32 %v1887, 4294901760
        %1889 = vmatmul.f32.gmra.mxu0 %v1888
        %v1890 = vpop.f32.mrf.mxu0
        %v1891 = vadd.f32 %v1769, %v1890
        %v1892 = vand.u32 %v424, 4294901760
        %v1893 = vsub.f32 %v424, %v1892
        %v1894 = vand.u32 %v1893, 4294901760
        %1895 = vmatmul.f32.gmra.mxu0 %v1894
        %v1896 = vpop.f32.mrf.mxu0
        %v1897 = vadd.f32 %v1774, %v1896
        %v1898 = vand.u32 %v425, 4294901760
        %v1899 = vsub.f32 %v425, %v1898
        %v1900 = vand.u32 %v1899, 4294901760
        %1901 = vmatmul.f32.gmra.mxu0 %v1900
        %v1902 = vpop.f32.mrf.mxu0
        %v1903 = vadd.f32 %v1779, %v1902
        %v1904 = vand.u32 %v426, 4294901760
        %v1905 = vsub.f32 %v426, %v1904
        %v1906 = vand.u32 %v1905, 4294901760
        %1907 = vmatmul.f32.gmra.mxu0 %v1906
        %v1908 = vpop.f32.mrf.mxu0
        %v1909 = vadd.f32 %v1784, %v1908
        %v1910 = vand.u32 %v427, 4294901760
        %v1911 = vsub.f32 %v427, %v1910
        %v1912 = vand.u32 %v1911, 4294901760
        %1913 = vmatmul.f32.gmra.mxu0 %v1912
        %v1914 = vpop.f32.mrf.mxu0
        %v1915 = vadd.f32 %v1789, %v1914
        %v1916 = vand.u32 %v428, 4294901760
        %v1917 = vsub.f32 %v428, %v1916
        %v1918 = vand.u32 %v1917, 4294901760
        %1919 = vmatmul.f32.gmra.mxu0 %v1918
        %v1920 = vpop.f32.mrf.mxu0
        %v1921 = vadd.f32 %v1794, %v1920
        %v1922 = vand.u32 %v429, 4294901760
        %v1923 = vsub.f32 %v429, %v1922
        %v1924 = vand.u32 %v1923, 4294901760
        %1925 = vmatmul.f32.gmra.mxu0 %v1924
        %v1926 = vpop.f32.mrf.mxu0
        %v1927 = vadd.f32 %v1799, %v1926
        %v1928 = vand.u32 %v430, 4294901760
        %v1929 = vsub.f32 %v430, %v1928
        %v1930 = vand.u32 %v1929, 4294901760
        %1931 = vmatmul.f32.gmra.mxu0 %v1930
        %v1932 = vpop.f32.mrf.mxu0
        %v1933 = vadd.f32 %v1804, %v1932
        %1934 = vdwg.mxu0
        %v1935 = vand.u32 %v548, 4294901760
        %v1936 = vsub.f32 %v548, %v1935
        %v1937 = vand.u32 %v1936, 4294901760
        %1938 = vmatpush.msra.mxu0 %v1937
        %v1939 = vand.u32 %v546, 4294901760
        %v1940 = vsub.f32 %v546, %v1939
        %v1941 = vand.u32 %v1940, 4294901760
        %1942 = vmatpush.msra.mxu0 %v1941
        %v1943 = vand.u32 %v544, 4294901760
        %v1944 = vsub.f32 %v544, %v1943
        %v1945 = vand.u32 %v1944, 4294901760
        %1946 = vmatpush.msra.mxu0 %v1945
        %v1947 = vand.u32 %v542, 4294901760
        %v1948 = vsub.f32 %v542, %v1947
        %v1949 = vand.u32 %v1948, 4294901760
        %1950 = vmatpush.msra.mxu0 %v1949
        %v1951 = vand.u32 %v540, 4294901760
        %v1952 = vsub.f32 %v540, %v1951
        %v1953 = vand.u32 %v1952, 4294901760
        %1954 = vmatpush.msra.mxu0 %v1953
        %v1955 = vand.u32 %v538, 4294901760
        %v1956 = vsub.f32 %v538, %v1955
        %v1957 = vand.u32 %v1956, 4294901760
        %1958 = vmatpush.msra.mxu0 %v1957
        %v1959 = vand.u32 %v536, 4294901760
        %v1960 = vsub.f32 %v536, %v1959
        %v1961 = vand.u32 %v1960, 4294901760
        %1962 = vmatpush.msra.mxu0 %v1961
        %v1963 = vand.u32 %v534, 4294901760
        %v1964 = vsub.f32 %v534, %v1963
        %v1965 = vand.u32 %v1964, 4294901760
        %1966 = vmatpush.msra.mxu0 %v1965
        %v1967 = vand.u32 %v532, 4294901760
        %v1968 = vsub.f32 %v532, %v1967
        %v1969 = vand.u32 %v1968, 4294901760
        %1970 = vmatpush.msra.mxu0 %v1969
        %v1971 = vand.u32 %v530, 4294901760
        %v1972 = vsub.f32 %v530, %v1971
        %v1973 = vand.u32 %v1972, 4294901760
        %1974 = vmatpush.msra.mxu0 %v1973
        %v1975 = vand.u32 %v528, 4294901760
        %v1976 = vsub.f32 %v528, %v1975
        %v1977 = vand.u32 %v1976, 4294901760
        %1978 = vmatpush.msra.mxu0 %v1977
        %v1979 = vand.u32 %v526, 4294901760
        %v1980 = vsub.f32 %v526, %v1979
        %v1981 = vand.u32 %v1980, 4294901760
        %1982 = vmatpush.msra.mxu0 %v1981
        %v1983 = vand.u32 %v524, 4294901760
        %v1984 = vsub.f32 %v524, %v1983
        %v1985 = vand.u32 %v1984, 4294901760
        %1986 = vmatpush.msra.mxu0 %v1985
        %v1987 = vand.u32 %v522, 4294901760
        %v1988 = vsub.f32 %v522, %v1987
        %v1989 = vand.u32 %v1988, 4294901760
        %1990 = vmatpush.msra.mxu0 %v1989
        %v1991 = vand.u32 %v520, 4294901760
        %v1992 = vsub.f32 %v520, %v1991
        %v1993 = vand.u32 %v1992, 4294901760
        %1994 = vmatpush.msra.mxu0 %v1993
        %v1995 = vand.u32 %v518, 4294901760
        %v1996 = vsub.f32 %v518, %v1995
        %v1997 = vand.u32 %v1996, 4294901760
        %1998 = vmatpush.msra.mxu0 %v1997
        %v1999 = vand.u32 %v415, 4294901760
        %2000 = vmatmul.f32.gmra.mxu0 %v1999
        %v2001 = vpop.f32.mrf.mxu0
        %v2002 = vadd.f32 %v1843, %v2001
        %v2003 = vand.u32 %v416, 4294901760
        %2004 = vmatmul.f32.gmra.mxu0 %v2003
        %v2005 = vpop.f32.mrf.mxu0
        %v2006 = vadd.f32 %v1849, %v2005
        %v2007 = vand.u32 %v417, 4294901760
        %2008 = vmatmul.f32.gmra.mxu0 %v2007
        %v2009 = vpop.f32.mrf.mxu0
        %v2010 = vadd.f32 %v1855, %v2009
        %v2011 = vand.u32 %v418, 4294901760
        %2012 = vmatmul.f32.gmra.mxu0 %v2011
        %v2013 = vpop.f32.mrf.mxu0
        %v2014 = vadd.f32 %v1861, %v2013
        %v2015 = vand.u32 %v419, 4294901760
        %2016 = vmatmul.f32.gmra.mxu0 %v2015
        %v2017 = vpop.f32.mrf.mxu0
        %v2018 = vadd.f32 %v1867, %v2017
        %v2019 = vand.u32 %v420, 4294901760
        %2020 = vmatmul.f32.gmra.mxu0 %v2019
        %v2021 = vpop.f32.mrf.mxu0
        %v2022 = vadd.f32 %v1873, %v2021
        %v2023 = vand.u32 %v421, 4294901760
        %2024 = vmatmul.f32.gmra.mxu0 %v2023
        %v2025 = vpop.f32.mrf.mxu0
        %v2026 = vadd.f32 %v1879, %v2025
        %v2027 = vand.u32 %v422, 4294901760
        %2028 = vmatmul.f32.gmra.mxu0 %v2027
        %v2029 = vpop.f32.mrf.mxu0
        %v2030 = vadd.f32 %v1885, %v2029
        %v2031 = vand.u32 %v423, 4294901760
        %2032 = vmatmul.f32.gmra.mxu0 %v2031
        %v2033 = vpop.f32.mrf.mxu0
        %v2034 = vadd.f32 %v1891, %v2033
        %v2035 = vand.u32 %v424, 4294901760
        %2036 = vmatmul.f32.gmra.mxu0 %v2035
        %v2037 = vpop.f32.mrf.mxu0
        %v2038 = vadd.f32 %v1897, %v2037
        %v2039 = vand.u32 %v425, 4294901760
        %2040 = vmatmul.f32.gmra.mxu0 %v2039
        %v2041 = vpop.f32.mrf.mxu0
        %v2042 = vadd.f32 %v1903, %v2041
        %v2043 = vand.u32 %v426, 4294901760
        %2044 = vmatmul.f32.gmra.mxu0 %v2043
        %v2045 = vpop.f32.mrf.mxu0
        %v2046 = vadd.f32 %v1909, %v2045
        %v2047 = vand.u32 %v427, 4294901760
        %2048 = vmatmul.f32.gmra.mxu0 %v2047
        %v2049 = vpop.f32.mrf.mxu0
        %v2050 = vadd.f32 %v1915, %v2049
        %v2051 = vand.u32 %v428, 4294901760
        %2052 = vmatmul.f32.gmra.mxu0 %v2051
        %v2053 = vpop.f32.mrf.mxu0
        %v2054 = vadd.f32 %v1921, %v2053
        %v2055 = vand.u32 %v429, 4294901760
        %2056 = vmatmul.f32.gmra.mxu0 %v2055
        %v2057 = vpop.f32.mrf.mxu0
        %v2058 = vadd.f32 %v1927, %v2057
        %v2059 = vand.u32 %v430, 4294901760
        %2060 = vmatmul.f32.gmra.mxu0 %v2059
        %v2061 = vpop.f32.mrf.mxu0
        %v2062 = vadd.f32 %v1933, %v2061
        %2063 = vdwg.mxu0
        %v2064 = vand.u32 %v548, 4294901760
        %2065 = vmatpush.msra.mxu0 %v2064
        %v2066 = vand.u32 %v546, 4294901760
        %2067 = vmatpush.msra.mxu0 %v2066
        %v2068 = vand.u32 %v544, 4294901760
        %2069 = vmatpush.msra.mxu0 %v2068
        %v2070 = vand.u32 %v542, 4294901760
        %2071 = vmatpush.msra.mxu0 %v2070
        %v2072 = vand.u32 %v540, 4294901760
        %2073 = vmatpush.msra.mxu0 %v2072
        %v2074 = vand.u32 %v538, 4294901760
        %2075 = vmatpush.msra.mxu0 %v2074
        %v2076 = vand.u32 %v536, 4294901760
        %2077 = vmatpush.msra.mxu0 %v2076
        %v2078 = vand.u32 %v534, 4294901760
        %2079 = vmatpush.msra.mxu0 %v2078
        %v2080 = vand.u32 %v532, 4294901760
        %2081 = vmatpush.msra.mxu0 %v2080
        %v2082 = vand.u32 %v530, 4294901760
        %2083 = vmatpush.msra.mxu0 %v2082
        %v2084 = vand.u32 %v528, 4294901760
        %2085 = vmatpush.msra.mxu0 %v2084
        %v2086 = vand.u32 %v526, 4294901760
        %2087 = vmatpush.msra.mxu0 %v2086
        %v2088 = vand.u32 %v524, 4294901760
        %2089 = vmatpush.msra.mxu0 %v2088
        %v2090 = vand.u32 %v522, 4294901760
        %2091 = vmatpush.msra.mxu0 %v2090
        %v2092 = vand.u32 %v520, 4294901760
        %2093 = vmatpush.msra.mxu0 %v2092
        %v2094 = vand.u32 %v518, 4294901760
        %2095 = vmatpush.msra.mxu0 %v2094
        %v2096 = vand.u32 %v415, 4294901760
        %2097 = vmatmul.f32.gmra.mxu0 %v2096
        %v2098 = vpop.f32.mrf.mxu0
        %v2099 = vadd.f32 %v2002, %v2098
        %v2100 = vand.u32 %v416, 4294901760
        %2101 = vmatmul.f32.gmra.mxu0 %v2100
        %v2102 = vpop.f32.mrf.mxu0
        %v2103 = vadd.f32 %v2006, %v2102
        %v2104 = vand.u32 %v417, 4294901760
        %2105 = vmatmul.f32.gmra.mxu0 %v2104
        %v2106 = vpop.f32.mrf.mxu0
        %v2107 = vadd.f32 %v2010, %v2106
        %v2108 = vand.u32 %v418, 4294901760
        %2109 = vmatmul.f32.gmra.mxu0 %v2108
        %v2110 = vpop.f32.mrf.mxu0
        %v2111 = vadd.f32 %v2014, %v2110
        %v2112 = vand.u32 %v419, 4294901760
        %2113 = vmatmul.f32.gmra.mxu0 %v2112
        %v2114 = vpop.f32.mrf.mxu0
        %v2115 = vadd.f32 %v2018, %v2114
        %v2116 = vand.u32 %v420, 4294901760
        %2117 = vmatmul.f32.gmra.mxu0 %v2116
        %v2118 = vpop.f32.mrf.mxu0
        %v2119 = vadd.f32 %v2022, %v2118
        %v2120 = vand.u32 %v421, 4294901760
        %2121 = vmatmul.f32.gmra.mxu0 %v2120
        %v2122 = vpop.f32.mrf.mxu0
        %v2123 = vadd.f32 %v2026, %v2122
        %v2124 = vand.u32 %v422, 4294901760
        %2125 = vmatmul.f32.gmra.mxu0 %v2124
        %v2126 = vpop.f32.mrf.mxu0
        %v2127 = vadd.f32 %v2030, %v2126
        %v2128 = vand.u32 %v423, 4294901760
        %2129 = vmatmul.f32.gmra.mxu0 %v2128
        %v2130 = vpop.f32.mrf.mxu0
        %v2131 = vadd.f32 %v2034, %v2130
        %v2132 = vand.u32 %v424, 4294901760
        %2133 = vmatmul.f32.gmra.mxu0 %v2132
        %v2134 = vpop.f32.mrf.mxu0
        %v2135 = vadd.f32 %v2038, %v2134
        %v2136 = vand.u32 %v425, 4294901760
        %2137 = vmatmul.f32.gmra.mxu0 %v2136
        %v2138 = vpop.f32.mrf.mxu0
        %v2139 = vadd.f32 %v2042, %v2138
        %v2140 = vand.u32 %v426, 4294901760
        %2141 = vmatmul.f32.gmra.mxu0 %v2140
        %v2142 = vpop.f32.mrf.mxu0
        %v2143 = vadd.f32 %v2046, %v2142
        %v2144 = vand.u32 %v427, 4294901760
        %2145 = vmatmul.f32.gmra.mxu0 %v2144
        %v2146 = vpop.f32.mrf.mxu0
        %v2147 = vadd.f32 %v2050, %v2146
        %v2148 = vand.u32 %v428, 4294901760
        %2149 = vmatmul.f32.gmra.mxu0 %v2148
        %v2150 = vpop.f32.mrf.mxu0
        %v2151 = vadd.f32 %v2054, %v2150
        %v2152 = vand.u32 %v429, 4294901760
        %2153 = vmatmul.f32.gmra.mxu0 %v2152
        %v2154 = vpop.f32.mrf.mxu0
        %v2155 = vadd.f32 %v2058, %v2154
        %v2156 = vand.u32 %v430, 4294901760
        %2157 = vmatmul.f32.gmra.mxu0 %v2156
        %v2158 = vpop.f32.mrf.mxu0
        %v2159 = vadd.f32 %v2062, %v2158
        %2160 = vdwg.mxu0
        %v2161 = vperm.slane %v431, 1
        %v2162 = vperm.slane %v431, 3
        %v2163 = vperm.slane %v2161, 1
        %v2164 = vperm.slane %v2162, 1
        %vm2165 = vcmp.eq.s32.totalorder %v433, %v2163
        %vm2166 = vcmp.eq.s32.totalorder %v433, %v2164
        %vm2167 = vcmp.eq.s32.totalorder %v434, %v2163
        %vm2168 = vcmp.eq.s32.totalorder %v434, %v2164
        %vm2169 = vcmp.eq.s32.totalorder %v435, %v2163
        %vm2170 = vcmp.eq.s32.totalorder %v435, %v2164
        %vm2171 = vcmp.eq.s32.totalorder %v436, %v2163
        %vm2172 = vcmp.eq.s32.totalorder %v436, %v2164
        %vm2173 = vcmp.eq.s32.totalorder %v437, %v2163
        %vm2174 = vcmp.eq.s32.totalorder %v437, %v2164
        %vm2175 = vcmp.eq.s32.totalorder %v438, %v2163
        %vm2176 = vcmp.eq.s32.totalorder %v438, %v2164
        %vm2177 = vcmp.eq.s32.totalorder %v439, %v2163
        %vm2178 = vcmp.eq.s32.totalorder %v439, %v2164
        %vm2179 = vcmp.eq.s32.totalorder %v440, %v2163
        %vm2180 = vcmp.eq.s32.totalorder %v440, %v2164
        %vm2181 = vcmp.eq.s32.totalorder %v441, %v2163
        %vm2182 = vcmp.eq.s32.totalorder %v441, %v2164
        %vm2183 = vcmp.eq.s32.totalorder %v442, %v2163
        %vm2184 = vcmp.eq.s32.totalorder %v442, %v2164
        %vm2185 = vcmp.eq.s32.totalorder %v443, %v2163
        %vm2186 = vcmp.eq.s32.totalorder %v443, %v2164
        %vm2187 = vcmp.eq.s32.totalorder %v444, %v2163
        %vm2188 = vcmp.eq.s32.totalorder %v444, %v2164
        %vm2189 = vcmp.eq.s32.totalorder %v445, %v2163
        %vm2190 = vcmp.eq.s32.totalorder %v445, %v2164
        %vm2191 = vcmp.eq.s32.totalorder %v446, %v2163
        %vm2192 = vcmp.eq.s32.totalorder %v446, %v2164
        %vm2193 = vcmp.eq.s32.totalorder %v447, %v2163
        %vm2194 = vcmp.eq.s32.totalorder %v447, %v2164
        %vm2195 = vcmp.eq.s32.totalorder %v448, %v2163
        %vm2196 = vcmp.eq.s32.totalorder %v448, %v2164
        %v2197 = vmul.f32 %v1293, %v1293
        %v2198 = vmul.f32 %v2099, %v2099
        %v2199 = vmul.f32 %v1297, %v1297
        %v2200 = vmul.f32 %v2103, %v2103
        %v2201 = vmul.f32 %v1301, %v1301
        %v2202 = vmul.f32 %v2107, %v2107
        %v2203 = vmul.f32 %v1305, %v1305
        %v2204 = vmul.f32 %v2111, %v2111
        %v2205 = vmul.f32 %v1309, %v1309
        %v2206 = vmul.f32 %v2115, %v2115
        %v2207 = vmul.f32 %v1313, %v1313
        %v2208 = vmul.f32 %v2119, %v2119
        %v2209 = vmul.f32 %v1317, %v1317
        %v2210 = vmul.f32 %v2123, %v2123
        %v2211 = vmul.f32 %v1321, %v1321
        %v2212 = vmul.f32 %v2127, %v2127
        %v2213 = vmul.f32 %v1325, %v1325
        %v2214 = vmul.f32 %v2131, %v2131
        %v2215 = vmul.f32 %v1329, %v1329
        %v2216 = vmul.f32 %v2135, %v2135
        %v2217 = vmul.f32 %v1333, %v1333
        %v2218 = vmul.f32 %v2139, %v2139
        %v2219 = vmul.f32 %v1337, %v1337
        %v2220 = vmul.f32 %v2143, %v2143
        %v2221 = vmul.f32 %v1341, %v1341
        %v2222 = vmul.f32 %v2147, %v2147
        %v2223 = vmul.f32 %v1345, %v1345
        %v2224 = vmul.f32 %v2151, %v2151
        %v2225 = vmul.f32 %v1349, %v1349
        %v2226 = vmul.f32 %v2155, %v2155
        %v2227 = vmul.f32 %v1353, %v1353
        %v2228 = vmul.f32 %v2159, %v2159
        %v2229 = vsel %vm2165, %v2197, 0.0
        %v2230 = vsel %vm2166, %v2198, 0.0
        %v2231 = vsel %vm2167, %v2199, 0.0
        %v2232 = vsel %vm2168, %v2200, 0.0
        %v2233 = vsel %vm2169, %v2201, 0.0
        %v2234 = vsel %vm2170, %v2202, 0.0
        %v2235 = vsel %vm2171, %v2203, 0.0
        %v2236 = vsel %vm2172, %v2204, 0.0
        %v2237 = vsel %vm2173, %v2205, 0.0
        %v2238 = vsel %vm2174, %v2206, 0.0
        %v2239 = vsel %vm2175, %v2207, 0.0
        %v2240 = vsel %vm2176, %v2208, 0.0
        %v2241 = vsel %vm2177, %v2209, 0.0
        %v2242 = vsel %vm2178, %v2210, 0.0
        %v2243 = vsel %vm2179, %v2211, 0.0
        %v2244 = vsel %vm2180, %v2212, 0.0
        %v2245 = vsel %vm2181, %v2213, 0.0
        %v2246 = vsel %vm2182, %v2214, 0.0
        %v2247 = vsel %vm2183, %v2215, 0.0
        %v2248 = vsel %vm2184, %v2216, 0.0
        %v2249 = vsel %vm2185, %v2217, 0.0
        %v2250 = vsel %vm2186, %v2218, 0.0
        %v2251 = vsel %vm2187, %v2219, 0.0
        %v2252 = vsel %vm2188, %v2220, 0.0
        %v2253 = vsel %vm2189, %v2221, 0.0
        %v2254 = vsel %vm2190, %v2222, 0.0
        %v2255 = vsel %vm2191, %v2223, 0.0
        %v2256 = vsel %vm2192, %v2224, 0.0
        %v2257 = vsel %vm2193, %v2225, 0.0
        %v2258 = vsel %vm2194, %v2226, 0.0
        %v2259 = vsel %vm2195, %v2227, 0.0
        %v2260 = vsel %vm2196, %v2228, 0.0
        %v2261 = vadd.f32 %v2229, %v2231
        %v2262 = vadd.f32 %v2261, %v2233
        %v2263 = vadd.f32 %v2262, %v2235
        %v2264 = vadd.f32 %v2263, %v2237
        %v2265 = vadd.f32 %v2264, %v2239
        %v2266 = vadd.f32 %v2265, %v2241
        %v2267 = vadd.f32 %v2266, %v2243
        %v2268 = vadd.f32 %v2267, %v2245
        %v2269 = vadd.f32 %v2268, %v2247
        %v2270 = vadd.f32 %v2269, %v2249
        %v2271 = vadd.f32 %v2270, %v2251
        %v2272 = vadd.f32 %v2271, %v2253
        %v2273 = vadd.f32 %v2272, %v2255
        %v2274 = vadd.f32 %v2273, %v2257
        %v2275 = vadd.f32 %v2274, %v2259
        %2276 = vadd.xlane.f32.xlu0 %v2275
        %v2277 = vpop.xlane.xlu0 %2276
        %v2278 = vrot.slane %v2277, 4
        %v2279 = vadd.f32 %v2277, %v2278
        %v2280 = vrot.slane %v2279, 2
        %v2281 = vadd.f32 %v2279, %v2280
        %v2282 = vrot.slane %v2281, 1
        %v2283 = vadd.f32 %v2281, %v2282
        %s2284 = vtos %v2283
        %v2285 = vstv %s2284
        %v2286 = vrsqrt.pop %v2285
        %v2287 = vmul.f32 %v2286, %v2285
        %v2288 = vmul.f32 %v2287, %v2286
        %v2289 = vmul.f32 0.5, %v2288
        %v2290 = vsub.f32 1.5, %v2289
        %v2291 = vmul.f32 %v2286, %v2290
        %v2292 = vmul.f32 %v2285, %v2291
        %vm2293 = vcmp.eq.f32.partialorder %v2285, inf
        %v2294 = vsel %vm2293, %v2285, %v2292
        %vm2295 = vcmp.eq.f32.partialorder %v2285, 0.0
        %v2296 = vand.u32 %v2285, 2147483648
        %v2297 = vsel %vm2295, %v2296, %v2294
        %s2298 = vtos %v2297
        %v2299 = vadd.f32 %v2230, %v2232
        %v2300 = vadd.f32 %v2299, %v2234
        %v2301 = vadd.f32 %v2300, %v2236
        %v2302 = vadd.f32 %v2301, %v2238
        %v2303 = vadd.f32 %v2302, %v2240
        %v2304 = vadd.f32 %v2303, %v2242
        %v2305 = vadd.f32 %v2304, %v2244
        %v2306 = vadd.f32 %v2305, %v2246
        %v2307 = vadd.f32 %v2306, %v2248
        %v2308 = vadd.f32 %v2307, %v2250
        %v2309 = vadd.f32 %v2308, %v2252
        %v2310 = vadd.f32 %v2309, %v2254
        %v2311 = vadd.f32 %v2310, %v2256
        %v2312 = vadd.f32 %v2311, %v2258
        %v2313 = vadd.f32 %v2312, %v2260
        %2314 = vadd.xlane.f32.xlu0 %v2313
        %v2315 = vpop.xlane.xlu0 %2314
        %v2316 = vrot.slane %v2315, 4
        %v2317 = vadd.f32 %v2315, %v2316
        %v2318 = vrot.slane %v2317, 2
        %v2319 = vadd.f32 %v2317, %v2318
        %v2320 = vrot.slane %v2319, 1
        %v2321 = vadd.f32 %v2319, %v2320
        %s2322 = vtos %v2321
        %v2323 = vstv %s2322
        %v2324 = vrsqrt.pop %v2323
        %v2325 = vmul.f32 %v2324, %v2323
        %v2326 = vmul.f32 %v2325, %v2324
        %v2327 = vmul.f32 0.5, %v2326
        %v2328 = vsub.f32 1.5, %v2327
        %v2329 = vmul.f32 %v2324, %v2328
        %v2330 = vmul.f32 %v2323, %v2329
        %vm2331 = vcmp.eq.f32.partialorder %v2323, inf
        %v2332 = vsel %vm2331, %v2323, %v2330
        %vm2333 = vcmp.eq.f32.partialorder %v2323, 0.0
        %v2334 = vand.u32 %v2323, 2147483648
        %v2335 = vsel %vm2333, %v2334, %v2332
        %s2336 = vtos %v2335
        %s2337 = sadd.f32 %s2298, %s2336
        %s2338 = smul.f32 %s2337, 0.5
        %v2339 = vstv %s2338
        %2340 = vst [vmem:[%s268] sm:$0x1] %v2339
        %s2341 = sand.u32 %s109, 1
        %s2342 = scalar_lea.sflag [#allocation4], %s2341
        %s2343 = sand.u32 %s109, 1
        %s2344 = scalar_lea.vmem [#allocation8], %s2343
        // Predicated region
        $region45: #{tpu_custom_call.1} parent=31 // pred_check
          %p2345 = pneg %p119
        $region46: #{tpu_custom_call.1} parent=31 // pred_check_branch
          %2347 = sbr.rel (%p2345) target = $region48
        $region47: #{tpu_custom_call.1} parent=31 // pred_region
          %2349 = vsyncadd %s2342, 0
          %s2350 = scalar_lea.hbm %s3, %s23
          %s2352 = sshll.u32 %s2344, 4
          %s2353 = int_to_ptr.vmem [resolvable:$true] %s2352
          %s2354 = sshll.u32 %s2350, 4
          %s2355 = int_to_ptr.hbm [resolvable:$true] %s2354
          %2357 = dma.vmem_to_hbm [thread:$0]  %s2353, 16, %s2355, %s2342
        $region48: #{tpu_custom_call.1} parent=31 // pred_fallthru
          _
      $region32: #{tpu_custom_call.1} parent=5 // pred_fallthru
        _
      %p2358 = scmp.le.s32.totalorder 2, %s18
      // Predicated region
      $region49: #{tpu_custom_call.1} parent=5 // pred_check
        %p2359 = pneg %p2358
      $region50: #{tpu_custom_call.1} parent=5 // pred_check_branch
        %2361 = sbr.rel (%p2359) target = $region52
      $region51: #{tpu_custom_call.1} parent=5 // pred_region
        %s2362 = ssub.s32 %s18, 2
        // Predicated region
        $region53: #{tpu_custom_call.1} parent=51 // pred_check
          %p2363 = pneg %p125
        $region54: #{tpu_custom_call.1} parent=51 // pred_check_branch
          %2365 = sbr.rel (%p2363) target = $region56
        $region55: #{tpu_custom_call.1} parent=51 // pred_region
          %s2366 = sand.u32 %s110, 1
          %s2367 = scalar_lea.sflag [#allocation4], %s2366
          %s2368 = sand.u32 %s110, 1
          %s2369 = scalar_lea.vmem [#allocation8], %s2368
          %2371 = dma.done %s2367, 16
        $region56: #{tpu_custom_call.1} parent=51 // pred_fallthru
          _
      $region52: #{tpu_custom_call.1} parent=5 // pred_fallthru
        _
    $region6: #{tpu_custom_call.1} parent=1 // loop_footer
      %s22 = sadd.s32 1, %s18
    $region7: #{tpu_custom_call.1} parent=1 // loop_footer_branch
      %17 = sbr.rel target = $region3
    $region8: #{tpu_custom_call.1} parent=1 // loop_exit
      _
    %2372 = vsyncpa [#allocation3], 1
    %s2373 = scalar_lea.sflag [#allocation3], 1
    %2374 = vsyncpa %s2373, 1
    %2375 = vsyncpa [#allocation6], 1
    %s2376 = scalar_lea.sflag [#allocation6], 1
    %2377 = vsyncpa %s2376, 1
    %2378 = vsyncpa [#allocation4], 1
    %s2379 = scalar_lea.sflag [#allocation4], 1
    %2380 = vsyncpa %s2379, 1

</llo_original>
